<compile_context>
chip_gen: v5e
topology: v5e:2x2
jax: 0.10.0
libtpu: 0.0.40
codegen_flags: <defaults>
</compile_context>

<pallas_src>
import jax
import jax.numpy as jnp
from jax.experimental import pallas as pl
from jax.experimental.pallas import tpu as pltpu

EPS = 1e-5           # torch.nn.LayerNorm default eps
H0_VALUE = 0.5       # minGRU initial hidden: h_0 = zeros -> g(0) = 0.5
LANE = 128


def _layernorm(x, g, b):
    mu = jnp.mean(x, axis=-1, keepdims=True)
    var = jnp.mean((x - mu) ** 2, axis=-1, keepdims=True)
    return (x - mu) * jax.lax.rsqrt(var + EPS) * g + b


def _silu(x):
    return x * jax.nn.sigmoid(x)


def _g_act(x):
    # minGRU "g": g(x) = x + 0.5 for x >= 0 else sigmoid(x)
    return jnp.where(x >= 0, x + 0.5, jax.nn.sigmoid(x))


def stacked_mamba_kernel(x_ref,
                         w1_ref, b1_ref, g_ln1_ref, b_ln1_ref,
                         w2_ref, b2_ref, g_ln2_ref, b_ln2_ref,
                         cw_ref, cb_ref, g_cln_ref, b_cln_ref,
                         wzh_ref, bzh_ref, g_gln_ref, b_gln_ref,
                         wd_ref, bd_ref,
                         out_ref,
                         x_scr):
    """grid = (batch_tiles, L). One step = one layer applied to one batch tile."""
    l = pl.program_id(1)
    n_layers = pl.num_programs(1)

    BT, T, Ipad = x_ref.shape
    H = w1_ref.shape[1]
    M = BT * T                                   # matmul M dimension

    # Load / initialize the residual-stream activation in the carry scratch.
    @pl.when(l == 0)
    def _():
        x_scr[...] = x_ref[...].reshape(M, Ipad)

    # time-within-sequence index: masks below use it so pltpu.roll along the
    # flattened (BT*T) axis never leaks rows across sequence boundaries.
    t_idx = jax.lax.broadcasted_iota(jnp.int32, (BT, T, H), 1).reshape(M, H)

    # ---- strand1 projection + LayerNorm (bf16 operands, f32 accumulation) ----
    x_bf = x_scr[...].astype(jnp.bfloat16)
    s1 = jnp.dot(x_bf, w1_ref[...], preferred_element_type=jnp.float32) + b1_ref[...]
    s1 = _layernorm(s1, g_ln1_ref[...], b_ln1_ref[...])

    # ---- Conv1d(k=3, padding=1) over time: one (M,H)@(H,3H) matmul whose taps
    #      are combined with sublane (time) rolls + sequence-edge masks ----
    y = jnp.dot(s1.astype(jnp.bfloat16), cw_ref[...],
                preferred_element_type=jnp.float32)                 # (M, 3H)
    y_prev = pltpu.roll(y[:, 0:H], shift=1, axis=0)                 # tap 0 -> s1[t-1]
    y_next = pltpu.roll(y[:, 2 * H:3 * H], shift=M - 1, axis=0)     # tap 2 -> s1[t+1]
    conv = (jnp.where(t_idx >= 1, y_prev, 0.0)
            + y[:, H:2 * H]
            + jnp.where(t_idx <= T - 2, y_next, 0.0)
            + cb_ref[...])
    conv = _silu(_layernorm(conv, g_cln_ref[...], b_cln_ref[...]))

    # ---- fused minGRU gate projections: one (M,H)@(H,2H) matmul ----
    gz = jnp.dot(conv.astype(jnp.bfloat16), wzh_ref[...],
                 preferred_element_type=jnp.float32) + bzh_ref[...]
    z = jax.nn.sigmoid(gz[:, :H])
    h_tilde = _g_act(gz[:, H:])

    # ---- minGRU recurrence h_t = (1-z_t) h_{t-1} + z_t h~_t, h_{-1}=0.5, as a
    #      Hillis-Steele scan of affine maps over time (kept in f32).
    #      Note: for very long T a chunked scan (intra-chunk HS + per-chunk
    #      aggregate scan) would cut the O(T log T) VPU/XLU work. ----
    a = 1.0 - z
    bcoef = z * h_tilde
    d = 1
    while d < T:
        a_prev = pltpu.roll(a, shift=d, axis=0)
        b_prev = pltpu.roll(bcoef, shift=d, axis=0)
        m = t_idx >= d
        a_new = jnp.where(m, a * a_prev, a)
        b_new = jnp.where(m, a * b_prev + bcoef, bcoef)
        a, bcoef = a_new, b_new
        d *= 2
    h_all = a * H0_VALUE + bcoef                                   # (M, H)

    # ---- epilogue: gru LayerNorm, strand2 (recomputed late to shorten its
    #      live range), gating, down-projection, residual ----
    strand1 = _layernorm(h_all, g_gln_ref[...], b_gln_ref[...])
    x_f32 = x_scr[...]
    s2 = _silu(_layernorm(
        jnp.dot(x_f32.astype(jnp.bfloat16), w2_ref[...],
                preferred_element_type=jnp.float32) + b2_ref[...],
        g_ln2_ref[...], b_ln2_ref[...]))
    x_new = (jnp.dot((strand1 * s2).astype(jnp.bfloat16), wd_ref[...],
                     preferred_element_type=jnp.float32)
             + bd_ref[...] + x_f32)
    x_scr[...] = x_new

    @pl.when(l == n_layers - 1)
    def _():
        out_ref[...] = x_new.reshape(BT, T, Ipad).astype(out_ref.dtype)


def _choose_b_tile(B, T, target_rows=512):
    """Largest divisor of B with B_TILE*T <= target_rows (fills the MXU M dim)."""
    bt = 1
    for cand in range(1, B + 1):
        if B % cand == 0 and cand * T <= max(target_rows, T):
            bt = cand
    return bt


def stacked_forward(x, packed, b_tile=None):
    B, T, I = x.shape
    L, Ipad, H = packed["w1"].shape
    if b_tile is None:
        b_tile = _choose_b_tile(B, T)
    assert B % b_tile == 0
    grid_b = B // b_tile
    M = b_tile * T

    # lane-dense feature dim: pad residual stream to Ipad (weights already padded)
    x_p = jnp.pad(x.astype(jnp.float32), ((0, 0), (0, 0), (0, Ipad - I)))

    names = ("w1", "b1", "g_ln1", "b_ln1", "w2", "b2", "g_ln2", "b_ln2",
             "cw", "cb", "g_cln", "b_cln", "wzh", "bzh", "g_gln", "b_gln",
             "wd", "bd")
    weights = [packed[n] for n in names]

    def layer_spec(arr):
        # stream one layer slice per inner grid step (double-buffered by Pallas)
        return pl.BlockSpec((None,) + tuple(arr.shape[1:]), lambda b, l: (l, 0, 0))

    in_specs = ([pl.BlockSpec((b_tile, T, Ipad), lambda b, l: (b, 0, 0))]
                + [layer_spec(a) for a in weights])

    weight_bytes = sum(int(a.size) * a.dtype.itemsize for a in weights)
    flops = 2 * B * T * L * (3 * Ipad * H + 5 * H * H)
    transcendentals = 8 * B * T * L * H
    bytes_accessed = grid_b * weight_bytes + 2 * B * T * Ipad * 4

    out = pl.pallas_call(
        stacked_mamba_kernel,
        grid=(grid_b, L),
        in_specs=in_specs,
        out_specs=pl.BlockSpec((b_tile, T, Ipad), lambda b, l: (b, 0, 0)),
        out_shape=jax.ShapeDtypeStruct((B, T, Ipad), jnp.float32),
        scratch_shapes=[pltpu.VMEM((M, Ipad), jnp.float32)],
        compiler_params=pltpu.CompilerParams(
            dimension_semantics=("parallel", "arbitrary"),
            vmem_limit_bytes=64 * 1024 * 1024),
        cost_estimate=pl.CostEstimate(
            flops=int(flops),
            transcendentals=int(transcendentals),
            bytes_accessed=int(bytes_accessed)),
    )(x_p, *weights)
    return out[..., :I]


# ---------------- deterministic synthetic parameters ----------------
def init_layers(key, L, I, H):
    layers = []
    for lk in jax.random.split(key, L):
        ks = jax.random.split(lk, 20)

        def xav(k, fi, fo):
            a = (6.0 / (fi + fo)) ** 0.5
            return jax.random.uniform(k, (fi, fo), jnp.float32, -a, a)

        def small(k, n):
            return 0.05 * jax.random.normal(k, (n,), jnp.float32)

        cbound = (6.0 / (H * 3)) ** 0.5
        layers.append(dict(
            w1=xav(ks[0], I, H), b1=small(ks[1], H),
            w2=xav(ks[2], I, H), b2=small(ks[3], H),
            cw=jax.random.uniform(ks[4], (3, H, H), jnp.float32, -cbound, cbound),
            cb=small(ks[5], H),
            wz=xav(ks[6], H, H), bz=small(ks[7], H),
            wh=xav(ks[8], H, H), bh=small(ks[9], H),
            wd=xav(ks[10], H, I), bd=small(ks[11], I),
            g_ln1=1.0 + small(ks[12], H), b_ln1=small(ks[13], H),
            g_ln2=1.0 + small(ks[14], H), b_ln2=small(ks[15], H),
            g_cln=1.0 + small(ks[16], H), b_cln=small(ks[17], H),
            g_gln=1.0 + small(ks[18], H), b_gln=small(ks[19], H),
        ))
    return layers


def pack_params(layers, lane=LANE):
    """Stack per-layer weights along L, pad feature dim I to a lane multiple,
    and cast matmul weights to bf16 (biases / LN params stay f32)."""
    I, H = layers[0]["w1"].shape
    Ipad = ((I + lane - 1) // lane) * lane
    bf = jnp.bfloat16

    def pad_in(w):   # (I,H) -> (Ipad,H), zero rows
        return jnp.pad(w, ((0, Ipad - I), (0, 0)))

    def pad_out(w):  # (H,I) -> (H,Ipad), zero cols
        return jnp.pad(w, ((0, 0), (0, Ipad - I)))

    def pad_vec(v):  # (I,) -> (Ipad,)
        return jnp.pad(v, (0, Ipad - I))

    def stk(fn, dtype=jnp.float32):
        return jnp.stack([fn(p) for p in layers]).astype(dtype)

    return dict(
        w1=stk(lambda p: pad_in(p["w1"]), bf),                               # (L, Ipad, H)
        b1=stk(lambda p: p["b1"][None, :]),                                  # (L, 1, H)
        g_ln1=stk(lambda p: p["g_ln1"][None, :]), b_ln1=stk(lambda p: p["b_ln1"][None, :]),
        w2=stk(lambda p: pad_in(p["w2"]), bf),                               # (L, Ipad, H)
        b2=stk(lambda p: p["b2"][None, :]),
        g_ln2=stk(lambda p: p["g_ln2"][None, :]), b_ln2=stk(lambda p: p["b_ln2"][None, :]),
        cw=stk(lambda p: jnp.concatenate([p["cw"][0], p["cw"][1], p["cw"][2]], axis=1), bf),  # (L,H,3H)
        cb=stk(lambda p: p["cb"][None, :]),
        g_cln=stk(lambda p: p["g_cln"][None, :]), b_cln=stk(lambda p: p["b_cln"][None, :]),
        wzh=stk(lambda p: jnp.concatenate([p["wz"], p["wh"]], axis=1), bf),  # (L, H, 2H)
        bzh=stk(lambda p: jnp.concatenate([p["bz"], p["bh"]])[None, :]),
        g_gln=stk(lambda p: p["g_gln"][None, :]), b_gln=stk(lambda p: p["b_gln"][None, :]),
        wd=stk(lambda p: pad_out(p["wd"]), bf),                              # (L, H, Ipad)
        bd=stk(lambda p: pad_vec(p["bd"])[None, :]),                         # (L, 1, Ipad)
    )


# ---------------- pure-JAX reference (sequential minGRU) ----------------
def ref_forward(x, layers, mm_dtype=jnp.float32):
    """Direct translation of StackedMambaMinGRU.forward.  mm_dtype rounds the
    matmul operands (use bfloat16 to match the kernel's MXU precision)."""
    def ln(v, g, b):
        mu = v.mean(-1, keepdims=True)
        var = ((v - mu) ** 2).mean(-1, keepdims=True)
        return (v - mu) / jnp.sqrt(var + EPS) * g + b

    def mm(a, w):
        return jnp.dot(a.astype(mm_dtype), w.astype(mm_dtype),
                       preferred_element_type=jnp.float32)

    silu = lambda v: v * jax.nn.sigmoid(v)
    g_act = lambda v: jnp.where(v >= 0, v + 0.5, jax.nn.sigmoid(v))
    Bsz, T, _ = x.shape
    for p in layers:
        H = p["w1"].shape[1]
        residual = x
        s1 = ln(mm(x, p["w1"]) + p["b1"], p["g_ln1"], p["b_ln1"])
        s1p = jnp.pad(s1, ((0, 0), (1, 1), (0, 0)))
        conv = (mm(s1p[:, 0:T], p["cw"][0]) + mm(s1p[:, 1:T + 1], p["cw"][1])
                + mm(s1p[:, 2:T + 2], p["cw"][2]) + p["cb"])
        conv = silu(ln(conv, p["g_cln"], p["b_cln"]))
        z = jax.nn.sigmoid(mm(conv, p["wz"]) + p["bz"])
        ht = g_act(mm(conv, p["wh"]) + p["bh"])
        h = jnp.full((Bsz, H), H0_VALUE, jnp.float32)
        hs = []
        for t in range(T):
            h = (1.0 - z[:, t]) * h + z[:, t] * ht[:, t]
            hs.append(h)
        strand1 = ln(jnp.stack(hs, axis=1), p["g_gln"], p["b_gln"])
        s2 = silu(ln(mm(x, p["w2"]) + p["b2"], p["g_ln2"], p["b_ln2"]))
        x = mm(strand1 * s2, p["wd"]) + p["bd"] + residual
    return x


if __name__ == "__main__":
    key = jax.random.PRNGKey(0)
    B, T, I, H, L = 2, 8, 16, 32, 2
    kx, kp = jax.random.split(key)
    x = jax.random.normal(kx, (B, T, I), jnp.float32)
    layers = init_layers(kp, L, I, H)
    packed = pack_params(layers)

    out = jax.block_until_ready(stacked_forward(x, packed))
    assert out.shape == (B, T, I)
    assert bool(jnp.all(jnp.isfinite(out)))

    # Structural check against a matched-precision reference (bf16 matmul
    # operands, f32 everywhere else -- same numerics as the kernel).
    ref_bf = ref_forward(x, layers, mm_dtype=jnp.bfloat16)
    diff_bf = float(jnp.max(jnp.abs(out - ref_bf)))
    assert jnp.allclose(out, ref_bf, atol=1e-2, rtol=1e-2), f"max diff vs matched ref {diff_bf}"

    # Coarse fidelity bound vs the full-f32 reference (bf16-matmul precision loss).
    ref_f32 = ref_forward(x, layers, mm_dtype=jnp.float32)
    diff_f32 = float(jnp.max(jnp.abs(out - ref_f32)))
    assert diff_f32 < 0.2, f"max diff vs f32 ref {diff_f32}"

    print("KERNEL_OK")
</pallas_src>

<mosaic_0001>
module attributes {stable_mosaic.version = 11 : i64} {
  func.func @stacked_mamba_kernel(%arg0: i32, %arg1: i32, %arg2: memref<2x8x128xf32, #tpu.memory_space<vmem>>, %arg3: memref<1x128x32xbf16, #tpu.memory_space<vmem>>, %arg4: memref<1x1x32xf32, #tpu.memory_space<vmem>>, %arg5: memref<1x1x32xf32, #tpu.memory_space<vmem>>, %arg6: memref<1x1x32xf32, #tpu.memory_space<vmem>>, %arg7: memref<1x128x32xbf16, #tpu.memory_space<vmem>>, %arg8: memref<1x1x32xf32, #tpu.memory_space<vmem>>, %arg9: memref<1x1x32xf32, #tpu.memory_space<vmem>>, %arg10: memref<1x1x32xf32, #tpu.memory_space<vmem>>, %arg11: memref<1x32x96xbf16, #tpu.memory_space<vmem>>, %arg12: memref<1x1x32xf32, #tpu.memory_space<vmem>>, %arg13: memref<1x1x32xf32, #tpu.memory_space<vmem>>, %arg14: memref<1x1x32xf32, #tpu.memory_space<vmem>>, %arg15: memref<1x32x64xbf16, #tpu.memory_space<vmem>>, %arg16: memref<1x1x64xf32, #tpu.memory_space<vmem>>, %arg17: memref<1x1x32xf32, #tpu.memory_space<vmem>>, %arg18: memref<1x1x32xf32, #tpu.memory_space<vmem>>, %arg19: memref<1x32x128xbf16, #tpu.memory_space<vmem>>, %arg20: memref<1x1x128xf32, #tpu.memory_space<vmem>>, %arg21: memref<2x8x128xf32, #tpu.memory_space<vmem>>, %arg22: memref<16x128xf32, #tpu.memory_space<vmem>>) attributes {dimension_semantics = [#tpu.dimension_semantics<parallel>, #tpu.dimension_semantics<arbitrary>], iteration_bounds = array<i64: 1, 2>, scalar_prefetch = 0 : i64, scratch_operands = 1 : i64, tpu.core_type = #tpu.core_type<tc>, window_params = [{transform_indices = @transform_0, window_bounds = array<i64: 2, 8, 128>}, {transform_indices = @transform_1, window_bounds = array<i64: 1, 128, 32>}, {transform_indices = @transform_2, window_bounds = array<i64: 1, 1, 32>}, {transform_indices = @transform_3, window_bounds = array<i64: 1, 1, 32>}, {transform_indices = @transform_4, window_bounds = array<i64: 1, 1, 32>}, {transform_indices = @transform_5, window_bounds = array<i64: 1, 128, 32>}, {transform_indices = @transform_6, window_bounds = array<i64: 1, 1, 32>}, {transform_indices = @transform_7, window_bounds = array<i64: 1, 1, 32>}, {transform_indices = @transform_8, window_bounds = array<i64: 1, 1, 32>}, {transform_indices = @transform_9, window_bounds = array<i64: 1, 32, 96>}, {transform_indices = @transform_10, window_bounds = array<i64: 1, 1, 32>}, {transform_indices = @transform_11, window_bounds = array<i64: 1, 1, 32>}, {transform_indices = @transform_12, window_bounds = array<i64: 1, 1, 32>}, {transform_indices = @transform_13, window_bounds = array<i64: 1, 32, 64>}, {transform_indices = @transform_14, window_bounds = array<i64: 1, 1, 64>}, {transform_indices = @transform_15, window_bounds = array<i64: 1, 1, 32>}, {transform_indices = @transform_16, window_bounds = array<i64: 1, 1, 32>}, {transform_indices = @transform_17, window_bounds = array<i64: 1, 32, 128>}, {transform_indices = @transform_18, window_bounds = array<i64: 1, 1, 128>}, {transform_indices = @transform_19, window_bounds = array<i64: 2, 8, 128>}]} {
    %c0_i32 = arith.constant 0 : i32
    %0 = arith.cmpi eq, %arg1, %c0_i32 : i32
    %1 = arith.extui %0 : i1 to i32
    %c0_i32_0 = arith.constant 0 : i32
    %2 = arith.cmpi ne, %1, %c0_i32_0 : i32
    scf.if %2 {
      %c0_104 = arith.constant 0 : index
      %c0_105 = arith.constant 0 : index
      %c0_106 = arith.constant 0 : index
      %234 = vector.load %arg2[%c0_104, %c0_105, %c0_106] : memref<2x8x128xf32, #tpu.memory_space<vmem>>, vector<2x8x128xf32>
      %235 = vector.shape_cast %234 : vector<2x8x128xf32> to vector<16x128xf32>
      %c0_107 = arith.constant 0 : index
      %c0_108 = arith.constant 0 : index
      %236 = vector.load %arg22[%c0_107, %c0_108] : memref<16x128xf32, #tpu.memory_space<vmem>>, vector<16x128xf32>
      tpu.vector_store %arg22[%c0_107, %c0_108], %235 {strides = array<i32>} : memref<16x128xf32, #tpu.memory_space<vmem>>, vector<16x128xf32>,
    } else {
    }
    %3 = tpu.iota {dimensions = array<i32: 1>} : vector<2x8x32xi32>
    %4 = vector.shape_cast %3 : vector<2x8x32xi32> to vector<16x32xi32>
    %c0 = arith.constant 0 : index
    %c0_1 = arith.constant 0 : index
    %5 = vector.load %arg22[%c0, %c0_1] : memref<16x128xf32, #tpu.memory_space<vmem>>, vector<16x128xf32>
    %6 = arith.truncf %5 : vector<16x128xf32> to vector<16x128xbf16>
    %c0_2 = arith.constant 0 : index
    %c0_3 = arith.constant 0 : index
    %c0_4 = arith.constant 0 : index
    %7 = vector.load %arg3[%c0_2, %c0_3, %c0_4] : memref<1x128x32xbf16, #tpu.memory_space<vmem>>, vector<1x128x32xbf16>
    %8 = vector.shape_cast %7 : vector<1x128x32xbf16> to vector<128x32xbf16>
    %cst = arith.constant dense<0.000000e+00> : vector<16x32xf32>
    %9 = tpu.matmul %6, %8, %cst {dimension_numbers = #tpu.dot_dimension_numbers<[1], [0], [0], [1], [0, 0, 1, 1], [], []>} : vector<16x128xbf16>, vector<128x32xbf16>, vector<16x32xf32> -> vector<16x32xf32>
    %c0_5 = arith.constant 0 : index
    %c0_6 = arith.constant 0 : index
    %c0_7 = arith.constant 0 : index
    %10 = vector.load %arg4[%c0_5, %c0_6, %c0_7] : memref<1x1x32xf32, #tpu.memory_space<vmem>>, vector<1x1x32xf32>
    %11 = vector.shape_cast %10 : vector<1x1x32xf32> to vector<1x32xf32>
    %12 = vector.broadcast %11 : vector<1x32xf32> to vector<16x32xf32>
    %13 = arith.addf %9, %12 : vector<16x32xf32>
    %c0_8 = arith.constant 0 : index
    %c0_9 = arith.constant 0 : index
    %c0_10 = arith.constant 0 : index
    %14 = vector.load %arg5[%c0_8, %c0_9, %c0_10] : memref<1x1x32xf32, #tpu.memory_space<vmem>>, vector<1x1x32xf32>
    %15 = vector.shape_cast %14 : vector<1x1x32xf32> to vector<1x32xf32>
    %c0_11 = arith.constant 0 : index
    %c0_12 = arith.constant 0 : index
    %c0_13 = arith.constant 0 : index
    %16 = vector.load %arg6[%c0_11, %c0_12, %c0_13] : memref<1x1x32xf32, #tpu.memory_space<vmem>>, vector<1x1x32xf32>
    %17 = vector.shape_cast %16 : vector<1x1x32xf32> to vector<1x32xf32>
    %cst_14 = arith.constant dense<0.000000e+00> : vector<16xf32>
    %18 = vector.multi_reduction <add>, %13, %cst_14 [1] : vector<16x32xf32> to vector<16xf32>
    %19 = vector.shape_cast %18 : vector<16xf32> to vector<16x1xf32>
    %cst_15 = arith.constant 3.200000e+01 : f32
    %20 = vector.broadcast %cst_15 : f32 to vector<16x1xf32>
    %21 = arith.divf %19, %20 : vector<16x1xf32>
    %22 = vector.broadcast %21 : vector<16x1xf32> to vector<16x32xf32>
    %23 = arith.subf %13, %22 : vector<16x32xf32>
    %24 = arith.mulf %23, %23 : vector<16x32xf32>
    %cst_16 = arith.constant dense<0.000000e+00> : vector<16xf32>
    %25 = vector.multi_reduction <add>, %24, %cst_16 [1] : vector<16x32xf32> to vector<16xf32>
    %26 = vector.shape_cast %25 : vector<16xf32> to vector<16x1xf32>
    %cst_17 = arith.constant 3.200000e+01 : f32
    %27 = vector.broadcast %cst_17 : f32 to vector<16x1xf32>
    %28 = arith.divf %26, %27 : vector<16x1xf32>
    %29 = vector.broadcast %21 : vector<16x1xf32> to vector<16x32xf32>
    %30 = arith.subf %13, %29 : vector<16x32xf32>
    %cst_18 = arith.constant 9.99999974E-6 : f32
    %31 = vector.broadcast %cst_18 : f32 to vector<16x1xf32>
    %32 = arith.addf %28, %31 : vector<16x1xf32>
    %33 = math.rsqrt %32 : vector<16x1xf32>
    %34 = vector.broadcast %33 : vector<16x1xf32> to vector<16x32xf32>
    %35 = arith.mulf %30, %34 : vector<16x32xf32>
    %36 = vector.broadcast %15 : vector<1x32xf32> to vector<16x32xf32>
    %37 = arith.mulf %35, %36 : vector<16x32xf32>
    %38 = vector.broadcast %17 : vector<1x32xf32> to vector<16x32xf32>
    %39 = arith.addf %37, %38 : vector<16x32xf32>
    %40 = arith.truncf %39 : vector<16x32xf32> to vector<16x32xbf16>
    %c0_19 = arith.constant 0 : index
    %c0_20 = arith.constant 0 : index
    %c0_21 = arith.constant 0 : index
    %41 = vector.load %arg11[%c0_19, %c0_20, %c0_21] : memref<1x32x96xbf16, #tpu.memory_space<vmem>>, vector<1x32x96xbf16>
    %42 = vector.shape_cast %41 : vector<1x32x96xbf16> to vector<32x96xbf16>
    %cst_22 = arith.constant dense<0.000000e+00> : vector<16x96xf32>
    %43 = tpu.matmul %40, %42, %cst_22 {dimension_numbers = #tpu.dot_dimension_numbers<[1], [0], [0], [1], [0, 0, 1, 1], [], []>} : vector<16x32xbf16>, vector<32x96xbf16>, vector<16x96xf32> -> vector<16x96xf32>
    %44 = vector.extract_strided_slice %43 {offsets = [0, 0], sizes = [16, 32], strides = [1, 1]} : vector<16x96xf32> to vector<16x32xf32>
    %c1_i32 = arith.constant 1 : i32
    %45 = tpu.dynamic_rotate %44 by %c1_i32 dim 0 : vector<16x32xf32>, i32 -> vector<16x32xf32>
    %46 = vector.extract_strided_slice %43 {offsets = [0, 64], sizes = [16, 32], strides = [1, 1]} : vector<16x96xf32> to vector<16x32xf32>
    %c15_i32 = arith.constant 15 : i32
    %47 = tpu.dynamic_rotate %46 by %c15_i32 dim 0 : vector<16x32xf32>, i32 -> vector<16x32xf32>
    %c1_i32_23 = arith.constant 1 : i32
    %48 = vector.broadcast %c1_i32_23 : i32 to vector<16x32xi32>
    %49 = arith.cmpi sge, %4, %48 : vector<16x32xi32>
    %cst_24 = arith.constant 0.000000e+00 : f32
    %50 = vector.broadcast %cst_24 : f32 to vector<16x32xf32>
    %51 = arith.select %49, %45, %50 : vector<16x32xi1>, vector<16x32xf32>
    %52 = vector.extract_strided_slice %43 {offsets = [0, 32], sizes = [16, 32], strides = [1, 1]} : vector<16x96xf32> to vector<16x32xf32>
    %53 = arith.addf %51, %52 : vector<16x32xf32>
    %c6_i32 = arith.constant 6 : i32
    %54 = vector.broadcast %c6_i32 : i32 to vector<16x32xi32>
    %55 = arith.cmpi sle, %4, %54 : vector<16x32xi32>
    %cst_25 = arith.constant 0.000000e+00 : f32
    %56 = vector.broadcast %cst_25 : f32 to vector<16x32xf32>
    %57 = arith.select %55, %47, %56 : vector<16x32xi1>, vector<16x32xf32>
    %58 = arith.addf %53, %57 : vector<16x32xf32>
    %c0_26 = arith.constant 0 : index
    %c0_27 = arith.constant 0 : index
    %c0_28 = arith.constant 0 : index
    %59 = vector.load %arg12[%c0_26, %c0_27, %c0_28] : memref<1x1x32xf32, #tpu.memory_space<vmem>>, vector<1x1x32xf32>
    %60 = vector.shape_cast %59 : vector<1x1x32xf32> to vector<1x32xf32>
    %61 = vector.broadcast %60 : vector<1x32xf32> to vector<16x32xf32>
    %62 = arith.addf %58, %61 : vector<16x32xf32>
    %c0_29 = arith.constant 0 : index
    %c0_30 = arith.constant 0 : index
    %c0_31 = arith.constant 0 : index
    %63 = vector.load %arg13[%c0_29, %c0_30, %c0_31] : memref<1x1x32xf32, #tpu.memory_space<vmem>>, vector<1x1x32xf32>
    %64 = vector.shape_cast %63 : vector<1x1x32xf32> to vector<1x32xf32>
    %c0_32 = arith.constant 0 : index
    %c0_33 = arith.constant 0 : index
    %c0_34 = arith.constant 0 : index
    %65 = vector.load %arg14[%c0_32, %c0_33, %c0_34] : memref<1x1x32xf32, #tpu.memory_space<vmem>>, vector<1x1x32xf32>
    %66 = vector.shape_cast %65 : vector<1x1x32xf32> to vector<1x32xf32>
    %cst_35 = arith.constant dense<0.000000e+00> : vector<16xf32>
    %67 = vector.multi_reduction <add>, %62, %cst_35 [1] : vector<16x32xf32> to vector<16xf32>
    %68 = vector.shape_cast %67 : vector<16xf32> to vector<16x1xf32>
    %cst_36 = arith.constant 3.200000e+01 : f32
    %69 = vector.broadcast %cst_36 : f32 to vector<16x1xf32>
    %70 = arith.divf %68, %69 : vector<16x1xf32>
    %71 = vector.broadcast %70 : vector<16x1xf32> to vector<16x32xf32>
    %72 = arith.subf %62, %71 : vector<16x32xf32>
    %73 = arith.mulf %72, %72 : vector<16x32xf32>
    %cst_37 = arith.constant dense<0.000000e+00> : vector<16xf32>
    %74 = vector.multi_reduction <add>, %73, %cst_37 [1] : vector<16x32xf32> to vector<16xf32>
    %75 = vector.shape_cast %74 : vector<16xf32> to vector<16x1xf32>
    %cst_38 = arith.constant 3.200000e+01 : f32
    %76 = vector.broadcast %cst_38 : f32 to vector<16x1xf32>
    %77 = arith.divf %75, %76 : vector<16x1xf32>
    %78 = vector.broadcast %70 : vector<16x1xf32> to vector<16x32xf32>
    %79 = arith.subf %62, %78 : vector<16x32xf32>
    %cst_39 = arith.constant 9.99999974E-6 : f32
    %80 = vector.broadcast %cst_39 : f32 to vector<16x1xf32>
    %81 = arith.addf %77, %80 : vector<16x1xf32>
    %82 = math.rsqrt %81 : vector<16x1xf32>
    %83 = vector.broadcast %82 : vector<16x1xf32> to vector<16x32xf32>
    %84 = arith.mulf %79, %83 : vector<16x32xf32>
    %85 = vector.broadcast %64 : vector<1x32xf32> to vector<16x32xf32>
    %86 = arith.mulf %84, %85 : vector<16x32xf32>
    %87 = vector.broadcast %66 : vector<1x32xf32> to vector<16x32xf32>
    %88 = arith.addf %86, %87 : vector<16x32xf32>
    %89 = arith.negf %88 : vector<16x32xf32>
    %90 = math.exp %89 : vector<16x32xf32>
    %cst_40 = arith.constant 1.000000e+00 : f32
    %91 = vector.broadcast %cst_40 : f32 to vector<16x32xf32>
    %92 = arith.addf %91, %90 : vector<16x32xf32>
    %93 = arith.divf %91, %92 : vector<16x32xf32>
    %94 = arith.mulf %88, %93 : vector<16x32xf32>
    %95 = arith.truncf %94 : vector<16x32xf32> to vector<16x32xbf16>
    %c0_41 = arith.constant 0 : index
    %c0_42 = arith.constant 0 : index
    %c0_43 = arith.constant 0 : index
    %96 = vector.load %arg15[%c0_41, %c0_42, %c0_43] : memref<1x32x64xbf16, #tpu.memory_space<vmem>>, vector<1x32x64xbf16>
    %97 = vector.shape_cast %96 : vector<1x32x64xbf16> to vector<32x64xbf16>
    %cst_44 = arith.constant dense<0.000000e+00> : vector<16x64xf32>
    %98 = tpu.matmul %95, %97, %cst_44 {dimension_numbers = #tpu.dot_dimension_numbers<[1], [0], [0], [1], [0, 0, 1, 1], [], []>} : vector<16x32xbf16>, vector<32x64xbf16>, vector<16x64xf32> -> vector<16x64xf32>
    %c0_45 = arith.constant 0 : index
    %c0_46 = arith.constant 0 : index
    %c0_47 = arith.constant 0 : index
    %99 = vector.load %arg16[%c0_45, %c0_46, %c0_47] : memref<1x1x64xf32, #tpu.memory_space<vmem>>, vector<1x1x64xf32>
    %100 = vector.shape_cast %99 : vector<1x1x64xf32> to vector<1x64xf32>
    %101 = vector.broadcast %100 : vector<1x64xf32> to vector<16x64xf32>
    %102 = arith.addf %98, %101 : vector<16x64xf32>
    %103 = vector.extract_strided_slice %102 {offsets = [0, 0], sizes = [16, 32], strides = [1, 1]} : vector<16x64xf32> to vector<16x32xf32>
    %104 = arith.negf %103 : vector<16x32xf32>
    %105 = math.exp %104 : vector<16x32xf32>
    %cst_48 = arith.constant 1.000000e+00 : f32
    %106 = vector.broadcast %cst_48 : f32 to vector<16x32xf32>
    %107 = arith.addf %106, %105 : vector<16x32xf32>
    %108 = arith.divf %106, %107 : vector<16x32xf32>
    %109 = vector.extract_strided_slice %102 {offsets = [0, 32], sizes = [16, 32], strides = [1, 1]} : vector<16x64xf32> to vector<16x32xf32>
    %cst_49 = arith.constant 0.000000e+00 : f32
    %110 = vector.broadcast %cst_49 : f32 to vector<16x32xf32>
    %111 = arith.cmpf oge, %109, %110 : vector<16x32xf32>
    %cst_50 = arith.constant 5.000000e-01 : f32
    %112 = vector.broadcast %cst_50 : f32 to vector<16x32xf32>
    %113 = arith.addf %109, %112 : vector<16x32xf32>
    %114 = arith.negf %109 : vector<16x32xf32>
    %115 = math.exp %114 : vector<16x32xf32>
    %cst_51 = arith.constant 1.000000e+00 : f32
    %116 = vector.broadcast %cst_51 : f32 to vector<16x32xf32>
    %117 = arith.addf %116, %115 : vector<16x32xf32>
    %118 = arith.divf %116, %117 : vector<16x32xf32>
    %119 = arith.select %111, %113, %118 : vector<16x32xi1>, vector<16x32xf32>
    %cst_52 = arith.constant 1.000000e+00 : f32
    %120 = vector.broadcast %cst_52 : f32 to vector<16x32xf32>
    %121 = arith.subf %120, %108 : vector<16x32xf32>
    %122 = arith.mulf %108, %119 : vector<16x32xf32>
    %c1_i32_53 = arith.constant 1 : i32
    %123 = tpu.dynamic_rotate %121 by %c1_i32_53 dim 0 : vector<16x32xf32>, i32 -> vector<16x32xf32>
    %c1_i32_54 = arith.constant 1 : i32
    %124 = tpu.dynamic_rotate %122 by %c1_i32_54 dim 0 : vector<16x32xf32>, i32 -> vector<16x32xf32>
    %c1_i32_55 = arith.constant 1 : i32
    %125 = vector.broadcast %c1_i32_55 : i32 to vector<16x32xi32>
    %126 = arith.cmpi sge, %4, %125 : vector<16x32xi32>
    %127 = arith.mulf %121, %123 : vector<16x32xf32>
    %128 = arith.select %126, %127, %121 : vector<16x32xi1>, vector<16x32xf32>
    %129 = arith.mulf %121, %124 : vector<16x32xf32>
    %130 = arith.addf %129, %122 : vector<16x32xf32>
    %131 = arith.select %126, %130, %122 : vector<16x32xi1>, vector<16x32xf32>
    %c2_i32 = arith.constant 2 : i32
    %132 = tpu.dynamic_rotate %128 by %c2_i32 dim 0 : vector<16x32xf32>, i32 -> vector<16x32xf32>
    %c2_i32_56 = arith.constant 2 : i32
    %133 = tpu.dynamic_rotate %131 by %c2_i32_56 dim 0 : vector<16x32xf32>, i32 -> vector<16x32xf32>
    %c2_i32_57 = arith.constant 2 : i32
    %134 = vector.broadcast %c2_i32_57 : i32 to vector<16x32xi32>
    %135 = arith.cmpi sge, %4, %134 : vector<16x32xi32>
    %136 = arith.mulf %128, %132 : vector<16x32xf32>
    %137 = arith.select %135, %136, %128 : vector<16x32xi1>, vector<16x32xf32>
    %138 = arith.mulf %128, %133 : vector<16x32xf32>
    %139 = arith.addf %138, %131 : vector<16x32xf32>
    %140 = arith.select %135, %139, %131 : vector<16x32xi1>, vector<16x32xf32>
    %c4_i32 = arith.constant 4 : i32
    %141 = tpu.dynamic_rotate %137 by %c4_i32 dim 0 : vector<16x32xf32>, i32 -> vector<16x32xf32>
    %c4_i32_58 = arith.constant 4 : i32
    %142 = tpu.dynamic_rotate %140 by %c4_i32_58 dim 0 : vector<16x32xf32>, i32 -> vector<16x32xf32>
    %c4_i32_59 = arith.constant 4 : i32
    %143 = vector.broadcast %c4_i32_59 : i32 to vector<16x32xi32>
    %144 = arith.cmpi sge, %4, %143 : vector<16x32xi32>
    %145 = arith.mulf %137, %141 : vector<16x32xf32>
    %146 = arith.select %144, %145, %137 : vector<16x32xi1>, vector<16x32xf32>
    %147 = arith.mulf %137, %142 : vector<16x32xf32>
    %148 = arith.addf %147, %140 : vector<16x32xf32>
    %149 = arith.select %144, %148, %140 : vector<16x32xi1>, vector<16x32xf32>
    %cst_60 = arith.constant 5.000000e-01 : f32
    %150 = vector.broadcast %cst_60 : f32 to vector<16x32xf32>
    %151 = arith.mulf %146, %150 : vector<16x32xf32>
    %152 = arith.addf %151, %149 : vector<16x32xf32>
    %c0_61 = arith.constant 0 : index
    %c0_62 = arith.constant 0 : index
    %c0_63 = arith.constant 0 : index
    %153 = vector.load %arg17[%c0_61, %c0_62, %c0_63] : memref<1x1x32xf32, #tpu.memory_space<vmem>>, vector<1x1x32xf32>
    %154 = vector.shape_cast %153 : vector<1x1x32xf32> to vector<1x32xf32>
    %c0_64 = arith.constant 0 : index
    %c0_65 = arith.constant 0 : index
    %c0_66 = arith.constant 0 : index
    %155 = vector.load %arg18[%c0_64, %c0_65, %c0_66] : memref<1x1x32xf32, #tpu.memory_space<vmem>>, vector<1x1x32xf32>
    %156 = vector.shape_cast %155 : vector<1x1x32xf32> to vector<1x32xf32>
    %cst_67 = arith.constant dense<0.000000e+00> : vector<16xf32>
    %157 = vector.multi_reduction <add>, %152, %cst_67 [1] : vector<16x32xf32> to vector<16xf32>
    %158 = vector.shape_cast %157 : vector<16xf32> to vector<16x1xf32>
    %cst_68 = arith.constant 3.200000e+01 : f32
    %159 = vector.broadcast %cst_68 : f32 to vector<16x1xf32>
    %160 = arith.divf %158, %159 : vector<16x1xf32>
    %161 = vector.broadcast %160 : vector<16x1xf32> to vector<16x32xf32>
    %162 = arith.subf %152, %161 : vector<16x32xf32>
    %163 = arith.mulf %162, %162 : vector<16x32xf32>
    %cst_69 = arith.constant dense<0.000000e+00> : vector<16xf32>
    %164 = vector.multi_reduction <add>, %163, %cst_69 [1] : vector<16x32xf32> to vector<16xf32>
    %165 = vector.shape_cast %164 : vector<16xf32> to vector<16x1xf32>
    %cst_70 = arith.constant 3.200000e+01 : f32
    %166 = vector.broadcast %cst_70 : f32 to vector<16x1xf32>
    %167 = arith.divf %165, %166 : vector<16x1xf32>
    %168 = vector.broadcast %160 : vector<16x1xf32> to vector<16x32xf32>
    %169 = arith.subf %152, %168 : vector<16x32xf32>
    %cst_71 = arith.constant 9.99999974E-6 : f32
    %170 = vector.broadcast %cst_71 : f32 to vector<16x1xf32>
    %171 = arith.addf %167, %170 : vector<16x1xf32>
    %172 = math.rsqrt %171 : vector<16x1xf32>
    %173 = vector.broadcast %172 : vector<16x1xf32> to vector<16x32xf32>
    %174 = arith.mulf %169, %173 : vector<16x32xf32>
    %175 = vector.broadcast %154 : vector<1x32xf32> to vector<16x32xf32>
    %176 = arith.mulf %174, %175 : vector<16x32xf32>
    %177 = vector.broadcast %156 : vector<1x32xf32> to vector<16x32xf32>
    %178 = arith.addf %176, %177 : vector<16x32xf32>
    %c0_72 = arith.constant 0 : index
    %c0_73 = arith.constant 0 : index
    %179 = vector.load %arg22[%c0_72, %c0_73] : memref<16x128xf32, #tpu.memory_space<vmem>>, vector<16x128xf32>
    %180 = arith.truncf %179 : vector<16x128xf32> to vector<16x128xbf16>
    %c0_74 = arith.constant 0 : index
    %c0_75 = arith.constant 0 : index
    %c0_76 = arith.constant 0 : index
    %181 = vector.load %arg7[%c0_74, %c0_75, %c0_76] : memref<1x128x32xbf16, #tpu.memory_space<vmem>>, vector<1x128x32xbf16>
    %182 = vector.shape_cast %181 : vector<1x128x32xbf16> to vector<128x32xbf16>
    %cst_77 = arith.constant dense<0.000000e+00> : vector<16x32xf32>
    %183 = tpu.matmul %180, %182, %cst_77 {dimension_numbers = #tpu.dot_dimension_numbers<[1], [0], [0], [1], [0, 0, 1, 1], [], []>} : vector<16x128xbf16>, vector<128x32xbf16>, vector<16x32xf32> -> vector<16x32xf32>
    %c0_78 = arith.constant 0 : index
    %c0_79 = arith.constant 0 : index
    %c0_80 = arith.constant 0 : index
    %184 = vector.load %arg8[%c0_78, %c0_79, %c0_80] : memref<1x1x32xf32, #tpu.memory_space<vmem>>, vector<1x1x32xf32>
    %185 = vector.shape_cast %184 : vector<1x1x32xf32> to vector<1x32xf32>
    %186 = vector.broadcast %185 : vector<1x32xf32> to vector<16x32xf32>
    %187 = arith.addf %183, %186 : vector<16x32xf32>
    %c0_81 = arith.constant 0 : index
    %c0_82 = arith.constant 0 : index
    %c0_83 = arith.constant 0 : index
    %188 = vector.load %arg9[%c0_81, %c0_82, %c0_83] : memref<1x1x32xf32, #tpu.memory_space<vmem>>, vector<1x1x32xf32>
    %189 = vector.shape_cast %188 : vector<1x1x32xf32> to vector<1x32xf32>
    %c0_84 = arith.constant 0 : index
    %c0_85 = arith.constant 0 : index
    %c0_86 = arith.constant 0 : index
    %190 = vector.load %arg10[%c0_84, %c0_85, %c0_86] : memref<1x1x32xf32, #tpu.memory_space<vmem>>, vector<1x1x32xf32>
    %191 = vector.shape_cast %190 : vector<1x1x32xf32> to vector<1x32xf32>
    %cst_87 = arith.constant dense<0.000000e+00> : vector<16xf32>
    %192 = vector.multi_reduction <add>, %187, %cst_87 [1] : vector<16x32xf32> to vector<16xf32>
    %193 = vector.shape_cast %192 : vector<16xf32> to vector<16x1xf32>
    %cst_88 = arith.constant 3.200000e+01 : f32
    %194 = vector.broadcast %cst_88 : f32 to vector<16x1xf32>
    %195 = arith.divf %193, %194 : vector<16x1xf32>
    %196 = vector.broadcast %195 : vector<16x1xf32> to vector<16x32xf32>
    %197 = arith.subf %187, %196 : vector<16x32xf32>
    %198 = arith.mulf %197, %197 : vector<16x32xf32>
    %cst_89 = arith.constant dense<0.000000e+00> : vector<16xf32>
    %199 = vector.multi_reduction <add>, %198, %cst_89 [1] : vector<16x32xf32> to vector<16xf32>
    %200 = vector.shape_cast %199 : vector<16xf32> to vector<16x1xf32>
    %cst_90 = arith.constant 3.200000e+01 : f32
    %201 = vector.broadcast %cst_90 : f32 to vector<16x1xf32>
    %202 = arith.divf %200, %201 : vector<16x1xf32>
    %203 = vector.broadcast %195 : vector<16x1xf32> to vector<16x32xf32>
    %204 = arith.subf %187, %203 : vector<16x32xf32>
    %cst_91 = arith.constant 9.99999974E-6 : f32
    %205 = vector.broadcast %cst_91 : f32 to vector<16x1xf32>
    %206 = arith.addf %202, %205 : vector<16x1xf32>
    %207 = math.rsqrt %206 : vector<16x1xf32>
    %208 = vector.broadcast %207 : vector<16x1xf32> to vector<16x32xf32>
    %209 = arith.mulf %204, %208 : vector<16x32xf32>
    %210 = vector.broadcast %189 : vector<1x32xf32> to vector<16x32xf32>
    %211 = arith.mulf %209, %210 : vector<16x32xf32>
    %212 = vector.broadcast %191 : vector<1x32xf32> to vector<16x32xf32>
    %213 = arith.addf %211, %212 : vector<16x32xf32>
    %214 = arith.negf %213 : vector<16x32xf32>
    %215 = math.exp %214 : vector<16x32xf32>
    %cst_92 = arith.constant 1.000000e+00 : f32
    %216 = vector.broadcast %cst_92 : f32 to vector<16x32xf32>
    %217 = arith.addf %216, %215 : vector<16x32xf32>
    %218 = arith.divf %216, %217 : vector<16x32xf32>
    %219 = arith.mulf %213, %218 : vector<16x32xf32>
    %220 = arith.mulf %178, %219 : vector<16x32xf32>
    %221 = arith.truncf %220 : vector<16x32xf32> to vector<16x32xbf16>
    %c0_93 = arith.constant 0 : index
    %c0_94 = arith.constant 0 : index
    %c0_95 = arith.constant 0 : index
    %222 = vector.load %arg19[%c0_93, %c0_94, %c0_95] : memref<1x32x128xbf16, #tpu.memory_space<vmem>>, vector<1x32x128xbf16>
    %223 = vector.shape_cast %222 : vector<1x32x128xbf16> to vector<32x128xbf16>
    %cst_96 = arith.constant dense<0.000000e+00> : vector<16x128xf32>
    %224 = tpu.matmul %221, %223, %cst_96 {dimension_numbers = #tpu.dot_dimension_numbers<[1], [0], [0], [1], [0, 0, 1, 1], [], []>} : vector<16x32xbf16>, vector<32x128xbf16>, vector<16x128xf32> -> vector<16x128xf32>
    %c0_97 = arith.constant 0 : index
    %c0_98 = arith.constant 0 : index
    %c0_99 = arith.constant 0 : index
    %225 = vector.load %arg20[%c0_97, %c0_98, %c0_99] : memref<1x1x128xf32, #tpu.memory_space<vmem>>, vector<1x1x128xf32>
    %226 = vector.shape_cast %225 : vector<1x1x128xf32> to vector<1x128xf32>
    %227 = vector.broadcast %226 : vector<1x128xf32> to vector<16x128xf32>
    %228 = arith.addf %224, %227 : vector<16x128xf32>
    %229 = arith.addf %228, %179 : vector<16x128xf32>
    %c0_100 = arith.constant 0 : index
    %c0_101 = arith.constant 0 : index
    %230 = vector.load %arg22[%c0_100, %c0_101] : memref<16x128xf32, #tpu.memory_space<vmem>>, vector<16x128xf32>
    tpu.vector_store %arg22[%c0_100, %c0_101], %229 {strides = array<i32>} : memref<16x128xf32, #tpu.memory_space<vmem>>, vector<16x128xf32>,
    %c1_i32_102 = arith.constant 1 : i32
    %231 = arith.cmpi eq, %arg1, %c1_i32_102 : i32
    %232 = arith.extui %231 : i1 to i32
    %c0_i32_103 = arith.constant 0 : i32
    %233 = arith.cmpi ne, %232, %c0_i32_103 : i32
    scf.if %233 {
      %234 = vector.shape_cast %229 : vector<16x128xf32> to vector<2x8x128xf32>
      %c0_104 = arith.constant 0 : index
      %c0_105 = arith.constant 0 : index
      %c0_106 = arith.constant 0 : index
      %235 = vector.load %arg21[%c0_104, %c0_105, %c0_106] : memref<2x8x128xf32, #tpu.memory_space<vmem>>, vector<2x8x128xf32>
      tpu.vector_store %arg21[%c0_104, %c0_105, %c0_106], %234 {strides = array<i32>} : memref<2x8x128xf32, #tpu.memory_space<vmem>>, vector<2x8x128xf32>,
    } else {
    }
    return
  }
  func.func @transform_0(%arg0: i32, %arg1: i32) -> (i32, i32, i32) {
    %c0_i32 = arith.constant 0 : i32
    %c0_i32_0 = arith.constant 0 : i32
    %c0_i32_1 = arith.constant 0 : i32
    return %arg0, %c0_i32, %c0_i32_0 : i32, i32, i32
  }
  func.func @transform_1(%arg0: i32, %arg1: i32) -> (i32, i32, i32) {
    %c0_i32 = arith.constant 0 : i32
    %c0_i32_0 = arith.constant 0 : i32
    %c0_i32_1 = arith.constant 0 : i32
    return %arg1, %c0_i32, %c0_i32_0 : i32, i32, i32
  }
  func.func @transform_2(%arg0: i32, %arg1: i32) -> (i32, i32, i32) {
    %c0_i32 = arith.constant 0 : i32
    %c0_i32_0 = arith.constant 0 : i32
    %c0_i32_1 = arith.constant 0 : i32
    return %arg1, %c0_i32, %c0_i32_0 : i32, i32, i32
  }
  func.func @transform_3(%arg0: i32, %arg1: i32) -> (i32, i32, i32) {
    %c0_i32 = arith.constant 0 : i32
    %c0_i32_0 = arith.constant 0 : i32
    %c0_i32_1 = arith.constant 0 : i32
    return %arg1, %c0_i32, %c0_i32_0 : i32, i32, i32
  }
  func.func @transform_4(%arg0: i32, %arg1: i32) -> (i32, i32, i32) {
    %c0_i32 = arith.constant 0 : i32
    %c0_i32_0 = arith.constant 0 : i32
    %c0_i32_1 = arith.constant 0 : i32
    return %arg1, %c0_i32, %c0_i32_0 : i32, i32, i32
  }
  func.func @transform_5(%arg0: i32, %arg1: i32) -> (i32, i32, i32) {
    %c0_i32 = arith.constant 0 : i32
    %c0_i32_0 = arith.constant 0 : i32
    %c0_i32_1 = arith.constant 0 : i32
    return %arg1, %c0_i32, %c0_i32_0 : i32, i32, i32
  }
  func.func @transform_6(%arg0: i32, %arg1: i32) -> (i32, i32, i32) {
    %c0_i32 = arith.constant 0 : i32
    %c0_i32_0 = arith.constant 0 : i32
    %c0_i32_1 = arith.constant 0 : i32
    return %arg1, %c0_i32, %c0_i32_0 : i32, i32, i32
  }
  func.func @transform_7(%arg0: i32, %arg1: i32) -> (i32, i32, i32) {
    %c0_i32 = arith.constant 0 : i32
    %c0_i32_0 = arith.constant 0 : i32
    %c0_i32_1 = arith.constant 0 : i32
    return %arg1, %c0_i32, %c0_i32_0 : i32, i32, i32
  }
  func.func @transform_8(%arg0: i32, %arg1: i32) -> (i32, i32, i32) {
    %c0_i32 = arith.constant 0 : i32
    %c0_i32_0 = arith.constant 0 : i32
    %c0_i32_1 = arith.constant 0 : i32
    return %arg1, %c0_i32, %c0_i32_0 : i32, i32, i32
  }
  func.func @transform_9(%arg0: i32, %arg1: i32) -> (i32, i32, i32) {
    %c0_i32 = arith.constant 0 : i32
    %c0_i32_0 = arith.constant 0 : i32
    %c0_i32_1 = arith.constant 0 : i32
    return %arg1, %c0_i32, %c0_i32_0 : i32, i32, i32
  }
  func.func @transform_10(%arg0: i32, %arg1: i32) -> (i32, i32, i32) {
    %c0_i32 = arith.constant 0 : i32
    %c0_i32_0 = arith.constant 0 : i32
    %c0_i32_1 = arith.constant 0 : i32
    return %arg1, %c0_i32, %c0_i32_0 : i32, i32, i32
  }
  func.func @transform_11(%arg0: i32, %arg1: i32) -> (i32, i32, i32) {
    %c0_i32 = arith.constant 0 : i32
    %c0_i32_0 = arith.constant 0 : i32
    %c0_i32_1 = arith.constant 0 : i32
    return %arg1, %c0_i32, %c0_i32_0 : i32, i32, i32
  }
  func.func @transform_12(%arg0: i32, %arg1: i32) -> (i32, i32, i32) {
    %c0_i32 = arith.constant 0 : i32
    %c0_i32_0 = arith.constant 0 : i32
    %c0_i32_1 = arith.constant 0 : i32
    return %arg1, %c0_i32, %c0_i32_0 : i32, i32, i32
  }
  func.func @transform_13(%arg0: i32, %arg1: i32) -> (i32, i32, i32) {
    %c0_i32 = arith.constant 0 : i32
    %c0_i32_0 = arith.constant 0 : i32
    %c0_i32_1 = arith.constant 0 : i32
    return %arg1, %c0_i32, %c0_i32_0 : i32, i32, i32
  }
  func.func @transform_14(%arg0: i32, %arg1: i32) -> (i32, i32, i32) {
    %c0_i32 = arith.constant 0 : i32
    %c0_i32_0 = arith.constant 0 : i32
    %c0_i32_1 = arith.constant 0 : i32
    return %arg1, %c0_i32, %c0_i32_0 : i32, i32, i32
  }
  func.func @transform_15(%arg0: i32, %arg1: i32) -> (i32, i32, i32) {
    %c0_i32 = arith.constant 0 : i32
    %c0_i32_0 = arith.constant 0 : i32
    %c0_i32_1 = arith.constant 0 : i32
    return %arg1, %c0_i32, %c0_i32_0 : i32, i32, i32
  }
  func.func @transform_16(%arg0: i32, %arg1: i32) -> (i32, i32, i32) {
    %c0_i32 = arith.constant 0 : i32
    %c0_i32_0 = arith.constant 0 : i32
    %c0_i32_1 = arith.constant 0 : i32
    return %arg1, %c0_i32, %c0_i32_0 : i32, i32, i32
  }
  func.func @transform_17(%arg0: i32, %arg1: i32) -> (i32, i32, i32) {
    %c0_i32 = arith.constant 0 : i32
    %c0_i32_0 = arith.constant 0 : i32
    %c0_i32_1 = arith.constant 0 : i32
    return %arg1, %c0_i32, %c0_i32_0 : i32, i32, i32
  }
  func.func @transform_18(%arg0: i32, %arg1: i32) -> (i32, i32, i32) {
    %c0_i32 = arith.constant 0 : i32
    %c0_i32_0 = arith.constant 0 : i32
    %c0_i32_1 = arith.constant 0 : i32
    return %arg1, %c0_i32, %c0_i32_0 : i32, i32, i32
  }
  func.func @transform_19(%arg0: i32, %arg1: i32) -> (i32, i32, i32) {
    %c0_i32 = arith.constant 0 : i32
    %c0_i32_0 = arith.constant 0 : i32
    %c0_i32_1 = arith.constant 0 : i32
    return %arg0, %c0_i32, %c0_i32_0 : i32, i32, i32
  }
}

</mosaic_0001>

<llo_original>
// kernel: tpu_custom_call.1
$region0: #{tpu_custom_call.1}
  #allocation0 [shape = 'u32[]', space=smem, size = 0x4, offset = 0x4, fixed_abs, tag = 'smem constant byte address 0x4 - core index']
  #allocation1 [shape = 'u32[72,128]{1,0:T(1,128)}', space=vmem, size = 0x9000, scoped, tag = 'internal scratch']
  #allocation2 [shape = 'f32[16,128]{1,0:T(8,128)}', space=vmem, size = 0x2000, scoped, tag = 'scratch operand']
  %s0 = inlined_call_operand.vmem [shape: f32[2,8,128], index: 0, kind: input, shape index: {}]
  %s1 = inlined_call_operand.vmem [shape: bf16[2,128,32], index: 1, kind: input, shape index: {}]
  %s2 = inlined_call_operand.vmem [shape: f32[2,1,32], index: 2, kind: input, shape index: {}]
  %s3 = inlined_call_operand.vmem [shape: f32[2,1,32], index: 3, kind: input, shape index: {}]
  %s4 = inlined_call_operand.vmem [shape: f32[2,1,32], index: 4, kind: input, shape index: {}]
  %s5 = inlined_call_operand.vmem [shape: bf16[2,128,32], index: 5, kind: input, shape index: {}]
  %s6 = inlined_call_operand.vmem [shape: f32[2,1,32], index: 6, kind: input, shape index: {}]
  %s7 = inlined_call_operand.vmem [shape: f32[2,1,32], index: 7, kind: input, shape index: {}]
  %s8 = inlined_call_operand.vmem [shape: f32[2,1,32], index: 8, kind: input, shape index: {}]
  %s9 = inlined_call_operand.vmem [shape: bf16[2,32,96], index: 9, kind: input, shape index: {}]
  %s10 = inlined_call_operand.vmem [shape: f32[2,1,32], index: 10, kind: input, shape index: {}]
  %s11 = inlined_call_operand.vmem [shape: f32[2,1,32], index: 11, kind: input, shape index: {}]
  %s12 = inlined_call_operand.vmem [shape: f32[2,1,32], index: 12, kind: input, shape index: {}]
  %s13 = inlined_call_operand.vmem [shape: bf16[2,32,64], index: 13, kind: input, shape index: {}]
  %s14 = inlined_call_operand.vmem [shape: f32[2,1,64], index: 14, kind: input, shape index: {}]
  %s15 = inlined_call_operand.vmem [shape: f32[2,1,32], index: 15, kind: input, shape index: {}]
  %s16 = inlined_call_operand.vmem [shape: f32[2,1,32], index: 16, kind: input, shape index: {}]
  %s17 = inlined_call_operand.vmem [shape: bf16[2,32,128], index: 17, kind: input, shape index: {}]
  %s18 = inlined_call_operand.vmem [shape: f32[2,1,128], index: 18, kind: input, shape index: {}]
  %s19 = inlined_call_operand.hbm [shape: f32[2,8,128], index: 19, kind: output, shape index: {}]
  %s20 = sld [smem:[#allocation0]]
  $region117: #{tpu_custom_call.1} parent=0
    _
  %s22 = ssub.s32 1, %s20
  %s23 = scalar_select 0, %s22, %s20
  $region1: #{tpu_custom_call.1} parent=0
    #allocation3 [shape = 'u8[8192]{0}', space=vmem, size = 0x2000, scoped, tag = 'output window, operand 0, single buffered']
    #allocation4 [shape = 's32[2]{0}', space=sflag, size = 0x8, scoped, tag = 'scoped memory for tpu_custom_call.1']
    %24 = vsyncpa [#allocation4], 0
    loop: start=0, step=1, limit=4
    $region2: #{tpu_custom_call.1} parent=1 // loop_pre_header
      _
    $region3: #{tpu_custom_call.1} parent=1 // loop_header
      %s26 = sphi 0, %s30
      %p27 = scmp.ge.s32.totalorder %s26, 4
      %s33 = sphi 0, %s45
      %s34 = sphi 0, %s41
      %s35 = sphi 0, %s33
      %s36 = sphi 0, %s34
      %s37 = sphi 0, %s35
      %s38 = sphi 0, %s36
      %s48 = sphi 0, %s50
      %s51 = sphi 0, %s48
      %s52 = sphi 0, %s51
      %s68 = sphi 0, %s52
      %s74 = sphi 0, %s76
      %s77 = sphi 0, %s74
      %s78 = sphi 0, %s77
      %s94 = sphi 0, %s78
      %s100 = sphi 0, %s102
      %s103 = sphi 0, %s100
      %s104 = sphi 0, %s103
      %s120 = sphi 0, %s104
      %s126 = sphi 0, %s128
      %s129 = sphi 0, %s126
      %s130 = sphi 0, %s129
      %s146 = sphi 0, %s130
      %s152 = sphi 0, %s154
      %s155 = sphi 0, %s152
      %s156 = sphi 0, %s155
      %s172 = sphi 0, %s156
      %s178 = sphi 0, %s180
      %s181 = sphi 0, %s178
      %s182 = sphi 0, %s181
      %s198 = sphi 0, %s182
      %s204 = sphi 0, %s206
      %s207 = sphi 0, %s204
      %s208 = sphi 0, %s207
      %s224 = sphi 0, %s208
      %s230 = sphi 0, %s232
      %s233 = sphi 0, %s230
      %s234 = sphi 0, %s233
      %s250 = sphi 0, %s234
      %s256 = sphi 0, %s258
      %s259 = sphi 0, %s256
      %s260 = sphi 0, %s259
      %s276 = sphi 0, %s260
      %s282 = sphi 0, %s284
      %s285 = sphi 0, %s282
      %s286 = sphi 0, %s285
      %s302 = sphi 0, %s286
      %s308 = sphi 0, %s310
      %s311 = sphi 0, %s308
      %s312 = sphi 0, %s311
      %s328 = sphi 0, %s312
      %s334 = sphi 0, %s336
      %s337 = sphi 0, %s334
      %s338 = sphi 0, %s337
      %s354 = sphi 0, %s338
      %s360 = sphi 0, %s362
      %s363 = sphi 0, %s360
      %s364 = sphi 0, %s363
      %s380 = sphi 0, %s364
      %s386 = sphi 0, %s388
      %s389 = sphi 0, %s386
      %s390 = sphi 0, %s389
      %s406 = sphi 0, %s390
      %s412 = sphi 0, %s414
      %s415 = sphi 0, %s412
      %s416 = sphi 0, %s415
      %s432 = sphi 0, %s416
      %s438 = sphi 0, %s440
      %s441 = sphi 0, %s438
      %s442 = sphi 0, %s441
      %s458 = sphi 0, %s442
      %s464 = sphi 0, %s466
      %s467 = sphi 0, %s464
      %s468 = sphi 0, %s467
      %s484 = sphi 0, %s468
      %s490 = sphi 0, %s492
      %s493 = sphi 0, %s490
      %s494 = sphi 0, %s493
      %s510 = sphi 0, %s494
      %s516 = sphi 0, %s518
      %s519 = sphi 0, %s516
      %s520 = sphi 0, %s519
      %s536 = sphi 0, %s520
      %s542 = sphi 0, %s544
      %s545 = sphi 0, %s542
      %s546 = sphi 0, %s545
      %s562 = sphi 0, %s546
    $region4: #{tpu_custom_call.1} parent=1 // loop_header_branch
      %29 = sbr.rel (%p27) target = $region8
    $region5: #{tpu_custom_call.1} parent=1 // loop_body
      %s31 = ssub.s32 %s26, 1
      %s32 = ssub.s32 %s26, 2
      %s39 = sadd.s32 1, %s34
      %p40 = scmp.ge.s32.totalorder %s39, 2
      %s41 = scalar_select %p40, 0, %s39
      %s42 = sadd.s32 1, %s33
      %s43 = scalar_select %p40, %s42, %s33
      %p44 = scmp.ge.s32.totalorder %s43, 1
      %s45 = scalar_select %p44, 0, %s43
      %s46 = ssub.s32 %s33, %s45
      %p47 = scmp.eq.s32.totalorder %s46, 0
      %s49 = sadd.s32 %s48, 1
      %s50 = scalar_select %p47, %s48, %s49
      %p53 = pneg %p47
      %p54 = scmp.eq.s32.totalorder %s26, 1
      %p55 = por %p53, %p54
      %p56 = scmp.ne.s32.totalorder %s48, %s51
      %p57 = scmp.eq.s32.totalorder %s26, 0
      %p58 = por %p56, %p57
      %p59 = scmp.ne.s32.totalorder %s48, %s51
      %p60 = scmp.eq.s32.totalorder %s31, 1
      %p61 = por %p59, %p60
      %p62 = scmp.ne.s32.totalorder %s51, %s52
      %p63 = scmp.eq.s32.totalorder %s31, 0
      %p64 = por %p62, %p63
      %p65 = scmp.ne.s32.totalorder %s51, %s52
      %p66 = scmp.eq.s32.totalorder %s32, 1
      %p67 = por %p65, %p66
      %p69 = scmp.ne.s32.totalorder %s52, %s68
      %p70 = scmp.eq.s32.totalorder %s32, 0
      %p71 = por %p69, %p70
      %s72 = ssub.s32 %s34, %s41
      %p73 = scmp.eq.s32.totalorder %s72, 0
      %s75 = sadd.s32 %s74, 1
      %s76 = scalar_select %p73, %s74, %s75
      %p79 = pneg %p73
      %p80 = scmp.eq.s32.totalorder %s26, 1
      %p81 = por %p79, %p80
      %p82 = scmp.ne.s32.totalorder %s74, %s77
      %p83 = scmp.eq.s32.totalorder %s26, 0
      %p84 = por %p82, %p83
      %p85 = scmp.ne.s32.totalorder %s74, %s77
      %p86 = scmp.eq.s32.totalorder %s31, 1
      %p87 = por %p85, %p86
      %p88 = scmp.ne.s32.totalorder %s77, %s78
      %p89 = scmp.eq.s32.totalorder %s31, 0
      %p90 = por %p88, %p89
      %p91 = scmp.ne.s32.totalorder %s77, %s78
      %p92 = scmp.eq.s32.totalorder %s32, 1
      %p93 = por %p91, %p92
      %p95 = scmp.ne.s32.totalorder %s78, %s94
      %p96 = scmp.eq.s32.totalorder %s32, 0
      %p97 = por %p95, %p96
      %s98 = ssub.s32 %s34, %s41
      %p99 = scmp.eq.s32.totalorder %s98, 0
      %s101 = sadd.s32 %s100, 1
      %s102 = scalar_select %p99, %s100, %s101
      %p105 = pneg %p99
      %p106 = scmp.eq.s32.totalorder %s26, 1
      %p107 = por %p105, %p106
      %p108 = scmp.ne.s32.totalorder %s100, %s103
      %p109 = scmp.eq.s32.totalorder %s26, 0
      %p110 = por %p108, %p109
      %p111 = scmp.ne.s32.totalorder %s100, %s103
      %p112 = scmp.eq.s32.totalorder %s31, 1
      %p113 = por %p111, %p112
      %p114 = scmp.ne.s32.totalorder %s103, %s104
      %p115 = scmp.eq.s32.totalorder %s31, 0
      %p116 = por %p114, %p115
      %p117 = scmp.ne.s32.totalorder %s103, %s104
      %p118 = scmp.eq.s32.totalorder %s32, 1
      %p119 = por %p117, %p118
      %p121 = scmp.ne.s32.totalorder %s104, %s120
      %p122 = scmp.eq.s32.totalorder %s32, 0
      %p123 = por %p121, %p122
      %s124 = ssub.s32 %s34, %s41
      %p125 = scmp.eq.s32.totalorder %s124, 0
      %s127 = sadd.s32 %s126, 1
      %s128 = scalar_select %p125, %s126, %s127
      %p131 = pneg %p125
      %p132 = scmp.eq.s32.totalorder %s26, 1
      %p133 = por %p131, %p132
      %p134 = scmp.ne.s32.totalorder %s126, %s129
      %p135 = scmp.eq.s32.totalorder %s26, 0
      %p136 = por %p134, %p135
      %p137 = scmp.ne.s32.totalorder %s126, %s129
      %p138 = scmp.eq.s32.totalorder %s31, 1
      %p139 = por %p137, %p138
      %p140 = scmp.ne.s32.totalorder %s129, %s130
      %p141 = scmp.eq.s32.totalorder %s31, 0
      %p142 = por %p140, %p141
      %p143 = scmp.ne.s32.totalorder %s129, %s130
      %p144 = scmp.eq.s32.totalorder %s32, 1
      %p145 = por %p143, %p144
      %p147 = scmp.ne.s32.totalorder %s130, %s146
      %p148 = scmp.eq.s32.totalorder %s32, 0
      %p149 = por %p147, %p148
      %s150 = ssub.s32 %s34, %s41
      %p151 = scmp.eq.s32.totalorder %s150, 0
      %s153 = sadd.s32 %s152, 1
      %s154 = scalar_select %p151, %s152, %s153
      %p157 = pneg %p151
      %p158 = scmp.eq.s32.totalorder %s26, 1
      %p159 = por %p157, %p158
      %p160 = scmp.ne.s32.totalorder %s152, %s155
      %p161 = scmp.eq.s32.totalorder %s26, 0
      %p162 = por %p160, %p161
      %p163 = scmp.ne.s32.totalorder %s152, %s155
      %p164 = scmp.eq.s32.totalorder %s31, 1
      %p165 = por %p163, %p164
      %p166 = scmp.ne.s32.totalorder %s155, %s156
      %p167 = scmp.eq.s32.totalorder %s31, 0
      %p168 = por %p166, %p167
      %p169 = scmp.ne.s32.totalorder %s155, %s156
      %p170 = scmp.eq.s32.totalorder %s32, 1
      %p171 = por %p169, %p170
      %p173 = scmp.ne.s32.totalorder %s156, %s172
      %p174 = scmp.eq.s32.totalorder %s32, 0
      %p175 = por %p173, %p174
      %s176 = ssub.s32 %s34, %s41
      %p177 = scmp.eq.s32.totalorder %s176, 0
      %s179 = sadd.s32 %s178, 1
      %s180 = scalar_select %p177, %s178, %s179
      %p183 = pneg %p177
      %p184 = scmp.eq.s32.totalorder %s26, 1
      %p185 = por %p183, %p184
      %p186 = scmp.ne.s32.totalorder %s178, %s181
      %p187 = scmp.eq.s32.totalorder %s26, 0
      %p188 = por %p186, %p187
      %p189 = scmp.ne.s32.totalorder %s178, %s181
      %p190 = scmp.eq.s32.totalorder %s31, 1
      %p191 = por %p189, %p190
      %p192 = scmp.ne.s32.totalorder %s181, %s182
      %p193 = scmp.eq.s32.totalorder %s31, 0
      %p194 = por %p192, %p193
      %p195 = scmp.ne.s32.totalorder %s181, %s182
      %p196 = scmp.eq.s32.totalorder %s32, 1
      %p197 = por %p195, %p196
      %p199 = scmp.ne.s32.totalorder %s182, %s198
      %p200 = scmp.eq.s32.totalorder %s32, 0
      %p201 = por %p199, %p200
      %s202 = ssub.s32 %s34, %s41
      %p203 = scmp.eq.s32.totalorder %s202, 0
      %s205 = sadd.s32 %s204, 1
      %s206 = scalar_select %p203, %s204, %s205
      %p209 = pneg %p203
      %p210 = scmp.eq.s32.totalorder %s26, 1
      %p211 = por %p209, %p210
      %p212 = scmp.ne.s32.totalorder %s204, %s207
      %p213 = scmp.eq.s32.totalorder %s26, 0
      %p214 = por %p212, %p213
      %p215 = scmp.ne.s32.totalorder %s204, %s207
      %p216 = scmp.eq.s32.totalorder %s31, 1
      %p217 = por %p215, %p216
      %p218 = scmp.ne.s32.totalorder %s207, %s208
      %p219 = scmp.eq.s32.totalorder %s31, 0
      %p220 = por %p218, %p219
      %p221 = scmp.ne.s32.totalorder %s207, %s208
      %p222 = scmp.eq.s32.totalorder %s32, 1
      %p223 = por %p221, %p222
      %p225 = scmp.ne.s32.totalorder %s208, %s224
      %p226 = scmp.eq.s32.totalorder %s32, 0
      %p227 = por %p225, %p226
      %s228 = ssub.s32 %s34, %s41
      %p229 = scmp.eq.s32.totalorder %s228, 0
      %s231 = sadd.s32 %s230, 1
      %s232 = scalar_select %p229, %s230, %s231
      %p235 = pneg %p229
      %p236 = scmp.eq.s32.totalorder %s26, 1
      %p237 = por %p235, %p236
      %p238 = scmp.ne.s32.totalorder %s230, %s233
      %p239 = scmp.eq.s32.totalorder %s26, 0
      %p240 = por %p238, %p239
      %p241 = scmp.ne.s32.totalorder %s230, %s233
      %p242 = scmp.eq.s32.totalorder %s31, 1
      %p243 = por %p241, %p242
      %p244 = scmp.ne.s32.totalorder %s233, %s234
      %p245 = scmp.eq.s32.totalorder %s31, 0
      %p246 = por %p244, %p245
      %p247 = scmp.ne.s32.totalorder %s233, %s234
      %p248 = scmp.eq.s32.totalorder %s32, 1
      %p249 = por %p247, %p248
      %p251 = scmp.ne.s32.totalorder %s234, %s250
      %p252 = scmp.eq.s32.totalorder %s32, 0
      %p253 = por %p251, %p252
      %s254 = ssub.s32 %s34, %s41
      %p255 = scmp.eq.s32.totalorder %s254, 0
      %s257 = sadd.s32 %s256, 1
      %s258 = scalar_select %p255, %s256, %s257
      %p261 = pneg %p255
      %p262 = scmp.eq.s32.totalorder %s26, 1
      %p263 = por %p261, %p262
      %p264 = scmp.ne.s32.totalorder %s256, %s259
      %p265 = scmp.eq.s32.totalorder %s26, 0
      %p266 = por %p264, %p265
      %p267 = scmp.ne.s32.totalorder %s256, %s259
      %p268 = scmp.eq.s32.totalorder %s31, 1
      %p269 = por %p267, %p268
      %p270 = scmp.ne.s32.totalorder %s259, %s260
      %p271 = scmp.eq.s32.totalorder %s31, 0
      %p272 = por %p270, %p271
      %p273 = scmp.ne.s32.totalorder %s259, %s260
      %p274 = scmp.eq.s32.totalorder %s32, 1
      %p275 = por %p273, %p274
      %p277 = scmp.ne.s32.totalorder %s260, %s276
      %p278 = scmp.eq.s32.totalorder %s32, 0
      %p279 = por %p277, %p278
      %s280 = ssub.s32 %s34, %s41
      %p281 = scmp.eq.s32.totalorder %s280, 0
      %s283 = sadd.s32 %s282, 1
      %s284 = scalar_select %p281, %s282, %s283
      %p287 = pneg %p281
      %p288 = scmp.eq.s32.totalorder %s26, 1
      %p289 = por %p287, %p288
      %p290 = scmp.ne.s32.totalorder %s282, %s285
      %p291 = scmp.eq.s32.totalorder %s26, 0
      %p292 = por %p290, %p291
      %p293 = scmp.ne.s32.totalorder %s282, %s285
      %p294 = scmp.eq.s32.totalorder %s31, 1
      %p295 = por %p293, %p294
      %p296 = scmp.ne.s32.totalorder %s285, %s286
      %p297 = scmp.eq.s32.totalorder %s31, 0
      %p298 = por %p296, %p297
      %p299 = scmp.ne.s32.totalorder %s285, %s286
      %p300 = scmp.eq.s32.totalorder %s32, 1
      %p301 = por %p299, %p300
      %p303 = scmp.ne.s32.totalorder %s286, %s302
      %p304 = scmp.eq.s32.totalorder %s32, 0
      %p305 = por %p303, %p304
      %s306 = ssub.s32 %s34, %s41
      %p307 = scmp.eq.s32.totalorder %s306, 0
      %s309 = sadd.s32 %s308, 1
      %s310 = scalar_select %p307, %s308, %s309
      %p313 = pneg %p307
      %p314 = scmp.eq.s32.totalorder %s26, 1
      %p315 = por %p313, %p314
      %p316 = scmp.ne.s32.totalorder %s308, %s311
      %p317 = scmp.eq.s32.totalorder %s26, 0
      %p318 = por %p316, %p317
      %p319 = scmp.ne.s32.totalorder %s308, %s311
      %p320 = scmp.eq.s32.totalorder %s31, 1
      %p321 = por %p319, %p320
      %p322 = scmp.ne.s32.totalorder %s311, %s312
      %p323 = scmp.eq.s32.totalorder %s31, 0
      %p324 = por %p322, %p323
      %p325 = scmp.ne.s32.totalorder %s311, %s312
      %p326 = scmp.eq.s32.totalorder %s32, 1
      %p327 = por %p325, %p326
      %p329 = scmp.ne.s32.totalorder %s312, %s328
      %p330 = scmp.eq.s32.totalorder %s32, 0
      %p331 = por %p329, %p330
      %s332 = ssub.s32 %s34, %s41
      %p333 = scmp.eq.s32.totalorder %s332, 0
      %s335 = sadd.s32 %s334, 1
      %s336 = scalar_select %p333, %s334, %s335
      %p339 = pneg %p333
      %p340 = scmp.eq.s32.totalorder %s26, 1
      %p341 = por %p339, %p340
      %p342 = scmp.ne.s32.totalorder %s334, %s337
      %p343 = scmp.eq.s32.totalorder %s26, 0
      %p344 = por %p342, %p343
      %p345 = scmp.ne.s32.totalorder %s334, %s337
      %p346 = scmp.eq.s32.totalorder %s31, 1
      %p347 = por %p345, %p346
      %p348 = scmp.ne.s32.totalorder %s337, %s338
      %p349 = scmp.eq.s32.totalorder %s31, 0
      %p350 = por %p348, %p349
      %p351 = scmp.ne.s32.totalorder %s337, %s338
      %p352 = scmp.eq.s32.totalorder %s32, 1
      %p353 = por %p351, %p352
      %p355 = scmp.ne.s32.totalorder %s338, %s354
      %p356 = scmp.eq.s32.totalorder %s32, 0
      %p357 = por %p355, %p356
      %s358 = ssub.s32 %s34, %s41
      %p359 = scmp.eq.s32.totalorder %s358, 0
      %s361 = sadd.s32 %s360, 1
      %s362 = scalar_select %p359, %s360, %s361
      %p365 = pneg %p359
      %p366 = scmp.eq.s32.totalorder %s26, 1
      %p367 = por %p365, %p366
      %p368 = scmp.ne.s32.totalorder %s360, %s363
      %p369 = scmp.eq.s32.totalorder %s26, 0
      %p370 = por %p368, %p369
      %p371 = scmp.ne.s32.totalorder %s360, %s363
      %p372 = scmp.eq.s32.totalorder %s31, 1
      %p373 = por %p371, %p372
      %p374 = scmp.ne.s32.totalorder %s363, %s364
      %p375 = scmp.eq.s32.totalorder %s31, 0
      %p376 = por %p374, %p375
      %p377 = scmp.ne.s32.totalorder %s363, %s364
      %p378 = scmp.eq.s32.totalorder %s32, 1
      %p379 = por %p377, %p378
      %p381 = scmp.ne.s32.totalorder %s364, %s380
      %p382 = scmp.eq.s32.totalorder %s32, 0
      %p383 = por %p381, %p382
      %s384 = ssub.s32 %s34, %s41
      %p385 = scmp.eq.s32.totalorder %s384, 0
      %s387 = sadd.s32 %s386, 1
      %s388 = scalar_select %p385, %s386, %s387
      %p391 = pneg %p385
      %p392 = scmp.eq.s32.totalorder %s26, 1
      %p393 = por %p391, %p392
      %p394 = scmp.ne.s32.totalorder %s386, %s389
      %p395 = scmp.eq.s32.totalorder %s26, 0
      %p396 = por %p394, %p395
      %p397 = scmp.ne.s32.totalorder %s386, %s389
      %p398 = scmp.eq.s32.totalorder %s31, 1
      %p399 = por %p397, %p398
      %p400 = scmp.ne.s32.totalorder %s389, %s390
      %p401 = scmp.eq.s32.totalorder %s31, 0
      %p402 = por %p400, %p401
      %p403 = scmp.ne.s32.totalorder %s389, %s390
      %p404 = scmp.eq.s32.totalorder %s32, 1
      %p405 = por %p403, %p404
      %p407 = scmp.ne.s32.totalorder %s390, %s406
      %p408 = scmp.eq.s32.totalorder %s32, 0
      %p409 = por %p407, %p408
      %s410 = ssub.s32 %s34, %s41
      %p411 = scmp.eq.s32.totalorder %s410, 0
      %s413 = sadd.s32 %s412, 1
      %s414 = scalar_select %p411, %s412, %s413
      %p417 = pneg %p411
      %p418 = scmp.eq.s32.totalorder %s26, 1
      %p419 = por %p417, %p418
      %p420 = scmp.ne.s32.totalorder %s412, %s415
      %p421 = scmp.eq.s32.totalorder %s26, 0
      %p422 = por %p420, %p421
      %p423 = scmp.ne.s32.totalorder %s412, %s415
      %p424 = scmp.eq.s32.totalorder %s31, 1
      %p425 = por %p423, %p424
      %p426 = scmp.ne.s32.totalorder %s415, %s416
      %p427 = scmp.eq.s32.totalorder %s31, 0
      %p428 = por %p426, %p427
      %p429 = scmp.ne.s32.totalorder %s415, %s416
      %p430 = scmp.eq.s32.totalorder %s32, 1
      %p431 = por %p429, %p430
      %p433 = scmp.ne.s32.totalorder %s416, %s432
      %p434 = scmp.eq.s32.totalorder %s32, 0
      %p435 = por %p433, %p434
      %s436 = ssub.s32 %s34, %s41
      %p437 = scmp.eq.s32.totalorder %s436, 0
      %s439 = sadd.s32 %s438, 1
      %s440 = scalar_select %p437, %s438, %s439
      %p443 = pneg %p437
      %p444 = scmp.eq.s32.totalorder %s26, 1
      %p445 = por %p443, %p444
      %p446 = scmp.ne.s32.totalorder %s438, %s441
      %p447 = scmp.eq.s32.totalorder %s26, 0
      %p448 = por %p446, %p447
      %p449 = scmp.ne.s32.totalorder %s438, %s441
      %p450 = scmp.eq.s32.totalorder %s31, 1
      %p451 = por %p449, %p450
      %p452 = scmp.ne.s32.totalorder %s441, %s442
      %p453 = scmp.eq.s32.totalorder %s31, 0
      %p454 = por %p452, %p453
      %p455 = scmp.ne.s32.totalorder %s441, %s442
      %p456 = scmp.eq.s32.totalorder %s32, 1
      %p457 = por %p455, %p456
      %p459 = scmp.ne.s32.totalorder %s442, %s458
      %p460 = scmp.eq.s32.totalorder %s32, 0
      %p461 = por %p459, %p460
      %s462 = ssub.s32 %s34, %s41
      %p463 = scmp.eq.s32.totalorder %s462, 0
      %s465 = sadd.s32 %s464, 1
      %s466 = scalar_select %p463, %s464, %s465
      %p469 = pneg %p463
      %p470 = scmp.eq.s32.totalorder %s26, 1
      %p471 = por %p469, %p470
      %p472 = scmp.ne.s32.totalorder %s464, %s467
      %p473 = scmp.eq.s32.totalorder %s26, 0
      %p474 = por %p472, %p473
      %p475 = scmp.ne.s32.totalorder %s464, %s467
      %p476 = scmp.eq.s32.totalorder %s31, 1
      %p477 = por %p475, %p476
      %p478 = scmp.ne.s32.totalorder %s467, %s468
      %p479 = scmp.eq.s32.totalorder %s31, 0
      %p480 = por %p478, %p479
      %p481 = scmp.ne.s32.totalorder %s467, %s468
      %p482 = scmp.eq.s32.totalorder %s32, 1
      %p483 = por %p481, %p482
      %p485 = scmp.ne.s32.totalorder %s468, %s484
      %p486 = scmp.eq.s32.totalorder %s32, 0
      %p487 = por %p485, %p486
      %s488 = ssub.s32 %s34, %s41
      %p489 = scmp.eq.s32.totalorder %s488, 0
      %s491 = sadd.s32 %s490, 1
      %s492 = scalar_select %p489, %s490, %s491
      %p495 = pneg %p489
      %p496 = scmp.eq.s32.totalorder %s26, 1
      %p497 = por %p495, %p496
      %p498 = scmp.ne.s32.totalorder %s490, %s493
      %p499 = scmp.eq.s32.totalorder %s26, 0
      %p500 = por %p498, %p499
      %p501 = scmp.ne.s32.totalorder %s490, %s493
      %p502 = scmp.eq.s32.totalorder %s31, 1
      %p503 = por %p501, %p502
      %p504 = scmp.ne.s32.totalorder %s493, %s494
      %p505 = scmp.eq.s32.totalorder %s31, 0
      %p506 = por %p504, %p505
      %p507 = scmp.ne.s32.totalorder %s493, %s494
      %p508 = scmp.eq.s32.totalorder %s32, 1
      %p509 = por %p507, %p508
      %p511 = scmp.ne.s32.totalorder %s494, %s510
      %p512 = scmp.eq.s32.totalorder %s32, 0
      %p513 = por %p511, %p512
      %s514 = ssub.s32 %s34, %s41
      %p515 = scmp.eq.s32.totalorder %s514, 0
      %s517 = sadd.s32 %s516, 1
      %s518 = scalar_select %p515, %s516, %s517
      %p521 = pneg %p515
      %p522 = scmp.eq.s32.totalorder %s26, 1
      %p523 = por %p521, %p522
      %p524 = scmp.ne.s32.totalorder %s516, %s519
      %p525 = scmp.eq.s32.totalorder %s26, 0
      %p526 = por %p524, %p525
      %p527 = scmp.ne.s32.totalorder %s516, %s519
      %p528 = scmp.eq.s32.totalorder %s31, 1
      %p529 = por %p527, %p528
      %p530 = scmp.ne.s32.totalorder %s519, %s520
      %p531 = scmp.eq.s32.totalorder %s31, 0
      %p532 = por %p530, %p531
      %p533 = scmp.ne.s32.totalorder %s519, %s520
      %p534 = scmp.eq.s32.totalorder %s32, 1
      %p535 = por %p533, %p534
      %p537 = scmp.ne.s32.totalorder %s520, %s536
      %p538 = scmp.eq.s32.totalorder %s32, 0
      %p539 = por %p537, %p538
      %s540 = ssub.s32 %s33, %s45
      %p541 = scmp.eq.s32.totalorder %s540, 0
      %s543 = sadd.s32 %s542, 1
      %s544 = scalar_select %p541, %s542, %s543
      %p547 = pneg %p541
      %p548 = scmp.eq.s32.totalorder %s26, 1
      %p549 = por %p547, %p548
      %p550 = scmp.ne.s32.totalorder %s542, %s545
      %p551 = scmp.eq.s32.totalorder %s26, 0
      %p552 = por %p550, %p551
      %p553 = scmp.ne.s32.totalorder %s542, %s545
      %p554 = scmp.eq.s32.totalorder %s31, 1
      %p555 = por %p553, %p554
      %p556 = scmp.ne.s32.totalorder %s545, %s546
      %p557 = scmp.eq.s32.totalorder %s31, 0
      %p558 = por %p556, %p557
      %p559 = scmp.ne.s32.totalorder %s545, %s546
      %p560 = scmp.eq.s32.totalorder %s32, 1
      %p561 = por %p559, %p560
      %p563 = scmp.ne.s32.totalorder %s546, %s562
      %p564 = scmp.eq.s32.totalorder %s32, 0
      %p565 = por %p563, %p564
      %p566 = scmp.le.s32.totalorder 1, %s26
      %p567 = scmp.lt.s32.totalorder %s26, 3
      %p568 = pnand %p566, %p567
      %p569 = pneg %p568
      // Predicated region
      $region9: #{tpu_custom_call.1} parent=5 // pred_check
        _
      $region10: #{tpu_custom_call.1} parent=5 // pred_check_branch
        %571 = sbr.rel (%p568) target = $region12
      $region11: #{tpu_custom_call.1} parent=5 // pred_region
        %s572 = ssub.s32 %s26, 1
        // Predicated region
        $region13: #{tpu_custom_call.1} parent=11 // pred_check
          %p573 = pneg %p64
        $region14: #{tpu_custom_call.1} parent=11 // pred_check_branch
          %575 = sbr.rel (%p573) target = $region16
        $region15: #{tpu_custom_call.1} parent=11 // pred_region
          %s576 = smul.u32 2, %s35
          %p577 = scmp.lt.s32.totalorder %s576, 1
          %s578 = scalar_select %p577, %s576, 1
          %s579 = smul.addr %s578, 8
          %s580 = scalar_lea.vmem %s0, %s579
          %s581 = smul.u32 2, %s35
        $region16: #{tpu_custom_call.1} parent=11 // pred_fallthru
          _
      $region12: #{tpu_custom_call.1} parent=5 // pred_fallthru
        _
      %p582 = scmp.lt.s32.totalorder %s26, 2
      // Predicated region
      $region17: #{tpu_custom_call.1} parent=5 // pred_check
        %p583 = pneg %p582
      $region18: #{tpu_custom_call.1} parent=5 // pred_check_branch
        %585 = sbr.rel (%p583) target = $region20
      $region19: #{tpu_custom_call.1} parent=5 // pred_region
        // Predicated region
        $region21: #{tpu_custom_call.1} parent=19 // pred_check
          %p586 = pneg %p84
        $region22: #{tpu_custom_call.1} parent=19 // pred_check_branch
          %588 = sbr.rel (%p586) target = $region24
        $region23: #{tpu_custom_call.1} parent=19 // pred_region
          %p589 = scmp.lt.s32.totalorder %s34, 1
          %s590 = scalar_select %p589, %s34, 1
          %s591 = smul.addr %s590, 16
          %s592 = smul.addr %s591, 4
          %s593 = scalar_lea.vmem %s1, %s592
        $region24: #{tpu_custom_call.1} parent=19 // pred_fallthru
          _
        // Predicated region
        $region25: #{tpu_custom_call.1} parent=19 // pred_check
          %p594 = pneg %p110
        $region26: #{tpu_custom_call.1} parent=19 // pred_check_branch
          %596 = sbr.rel (%p594) target = $region28
        $region27: #{tpu_custom_call.1} parent=19 // pred_region
          %p597 = scmp.lt.s32.totalorder %s34, 1
          %s598 = scalar_select %p597, %s34, 1
          %s599 = scalar_lea.vmem %s2, %s598
        $region28: #{tpu_custom_call.1} parent=19 // pred_fallthru
          _
        // Predicated region
        $region29: #{tpu_custom_call.1} parent=19 // pred_check
          %p600 = pneg %p136
        $region30: #{tpu_custom_call.1} parent=19 // pred_check_branch
          %602 = sbr.rel (%p600) target = $region32
        $region31: #{tpu_custom_call.1} parent=19 // pred_region
          %p603 = scmp.lt.s32.totalorder %s34, 1
          %s604 = scalar_select %p603, %s34, 1
          %s605 = scalar_lea.vmem %s3, %s604
        $region32: #{tpu_custom_call.1} parent=19 // pred_fallthru
          _
        // Predicated region
        $region33: #{tpu_custom_call.1} parent=19 // pred_check
          %p606 = pneg %p162
        $region34: #{tpu_custom_call.1} parent=19 // pred_check_branch
          %608 = sbr.rel (%p606) target = $region36
        $region35: #{tpu_custom_call.1} parent=19 // pred_region
          %p609 = scmp.lt.s32.totalorder %s34, 1
          %s610 = scalar_select %p609, %s34, 1
          %s611 = scalar_lea.vmem %s4, %s610
        $region36: #{tpu_custom_call.1} parent=19 // pred_fallthru
          _
        // Predicated region
        $region37: #{tpu_custom_call.1} parent=19 // pred_check
          %p612 = pneg %p188
        $region38: #{tpu_custom_call.1} parent=19 // pred_check_branch
          %614 = sbr.rel (%p612) target = $region40
        $region39: #{tpu_custom_call.1} parent=19 // pred_region
          %p615 = scmp.lt.s32.totalorder %s34, 1
          %s616 = scalar_select %p615, %s34, 1
          %s617 = smul.addr %s616, 16
          %s618 = smul.addr %s617, 4
          %s619 = scalar_lea.vmem %s5, %s618
        $region40: #{tpu_custom_call.1} parent=19 // pred_fallthru
          _
        // Predicated region
        $region41: #{tpu_custom_call.1} parent=19 // pred_check
          %p620 = pneg %p214
        $region42: #{tpu_custom_call.1} parent=19 // pred_check_branch
          %622 = sbr.rel (%p620) target = $region44
        $region43: #{tpu_custom_call.1} parent=19 // pred_region
          %p623 = scmp.lt.s32.totalorder %s34, 1
          %s624 = scalar_select %p623, %s34, 1
          %s625 = scalar_lea.vmem %s6, %s624
        $region44: #{tpu_custom_call.1} parent=19 // pred_fallthru
          _
        // Predicated region
        $region45: #{tpu_custom_call.1} parent=19 // pred_check
          %p626 = pneg %p240
        $region46: #{tpu_custom_call.1} parent=19 // pred_check_branch
          %628 = sbr.rel (%p626) target = $region48
        $region47: #{tpu_custom_call.1} parent=19 // pred_region
          %p629 = scmp.lt.s32.totalorder %s34, 1
          %s630 = scalar_select %p629, %s34, 1
          %s631 = scalar_lea.vmem %s7, %s630
        $region48: #{tpu_custom_call.1} parent=19 // pred_fallthru
          _
        // Predicated region
        $region49: #{tpu_custom_call.1} parent=19 // pred_check
          %p632 = pneg %p266
        $region50: #{tpu_custom_call.1} parent=19 // pred_check_branch
          %634 = sbr.rel (%p632) target = $region52
        $region51: #{tpu_custom_call.1} parent=19 // pred_region
          %p635 = scmp.lt.s32.totalorder %s34, 1
          %s636 = scalar_select %p635, %s34, 1
          %s637 = scalar_lea.vmem %s8, %s636
        $region52: #{tpu_custom_call.1} parent=19 // pred_fallthru
          _
        // Predicated region
        $region53: #{tpu_custom_call.1} parent=19 // pred_check
          %p638 = pneg %p292
        $region54: #{tpu_custom_call.1} parent=19 // pred_check_branch
          %640 = sbr.rel (%p638) target = $region56
        $region55: #{tpu_custom_call.1} parent=19 // pred_region
          %p641 = scmp.lt.s32.totalorder %s34, 1
          %s642 = scalar_select %p641, %s34, 1
          %s643 = smul.addr %s642, 4
          %s644 = smul.addr %s643, 4
          %s645 = scalar_lea.vmem %s9, %s644
        $region56: #{tpu_custom_call.1} parent=19 // pred_fallthru
          _
        // Predicated region
        $region57: #{tpu_custom_call.1} parent=19 // pred_check
          %p646 = pneg %p318
        $region58: #{tpu_custom_call.1} parent=19 // pred_check_branch
          %648 = sbr.rel (%p646) target = $region60
        $region59: #{tpu_custom_call.1} parent=19 // pred_region
          %p649 = scmp.lt.s32.totalorder %s34, 1
          %s650 = scalar_select %p649, %s34, 1
          %s651 = scalar_lea.vmem %s10, %s650
        $region60: #{tpu_custom_call.1} parent=19 // pred_fallthru
          _
        // Predicated region
        $region61: #{tpu_custom_call.1} parent=19 // pred_check
          %p652 = pneg %p344
        $region62: #{tpu_custom_call.1} parent=19 // pred_check_branch
          %654 = sbr.rel (%p652) target = $region64
        $region63: #{tpu_custom_call.1} parent=19 // pred_region
          %p655 = scmp.lt.s32.totalorder %s34, 1
          %s656 = scalar_select %p655, %s34, 1
          %s657 = scalar_lea.vmem %s11, %s656
        $region64: #{tpu_custom_call.1} parent=19 // pred_fallthru
          _
        // Predicated region
        $region65: #{tpu_custom_call.1} parent=19 // pred_check
          %p658 = pneg %p370
        $region66: #{tpu_custom_call.1} parent=19 // pred_check_branch
          %660 = sbr.rel (%p658) target = $region68
        $region67: #{tpu_custom_call.1} parent=19 // pred_region
          %p661 = scmp.lt.s32.totalorder %s34, 1
          %s662 = scalar_select %p661, %s34, 1
          %s663 = scalar_lea.vmem %s12, %s662
        $region68: #{tpu_custom_call.1} parent=19 // pred_fallthru
          _
        // Predicated region
        $region69: #{tpu_custom_call.1} parent=19 // pred_check
          %p664 = pneg %p396
        $region70: #{tpu_custom_call.1} parent=19 // pred_check_branch
          %666 = sbr.rel (%p664) target = $region72
        $region71: #{tpu_custom_call.1} parent=19 // pred_region
          %p667 = scmp.lt.s32.totalorder %s34, 1
          %s668 = scalar_select %p667, %s34, 1
          %s669 = smul.addr %s668, 4
          %s670 = smul.addr %s669, 4
          %s671 = scalar_lea.vmem %s13, %s670
        $region72: #{tpu_custom_call.1} parent=19 // pred_fallthru
          _
        // Predicated region
        $region73: #{tpu_custom_call.1} parent=19 // pred_check
          %p672 = pneg %p422
        $region74: #{tpu_custom_call.1} parent=19 // pred_check_branch
          %674 = sbr.rel (%p672) target = $region76
        $region75: #{tpu_custom_call.1} parent=19 // pred_region
          %p675 = scmp.lt.s32.totalorder %s34, 1
          %s676 = scalar_select %p675, %s34, 1
          %s677 = scalar_lea.vmem %s14, %s676
        $region76: #{tpu_custom_call.1} parent=19 // pred_fallthru
          _
        // Predicated region
        $region77: #{tpu_custom_call.1} parent=19 // pred_check
          %p678 = pneg %p448
        $region78: #{tpu_custom_call.1} parent=19 // pred_check_branch
          %680 = sbr.rel (%p678) target = $region80
        $region79: #{tpu_custom_call.1} parent=19 // pred_region
          %p681 = scmp.lt.s32.totalorder %s34, 1
          %s682 = scalar_select %p681, %s34, 1
          %s683 = scalar_lea.vmem %s15, %s682
        $region80: #{tpu_custom_call.1} parent=19 // pred_fallthru
          _
        // Predicated region
        $region81: #{tpu_custom_call.1} parent=19 // pred_check
          %p684 = pneg %p474
        $region82: #{tpu_custom_call.1} parent=19 // pred_check_branch
          %686 = sbr.rel (%p684) target = $region84
        $region83: #{tpu_custom_call.1} parent=19 // pred_region
          %p687 = scmp.lt.s32.totalorder %s34, 1
          %s688 = scalar_select %p687, %s34, 1
          %s689 = scalar_lea.vmem %s16, %s688
        $region84: #{tpu_custom_call.1} parent=19 // pred_fallthru
          _
        // Predicated region
        $region85: #{tpu_custom_call.1} parent=19 // pred_check
          %p690 = pneg %p500
        $region86: #{tpu_custom_call.1} parent=19 // pred_check_branch
          %692 = sbr.rel (%p690) target = $region88
        $region87: #{tpu_custom_call.1} parent=19 // pred_region
          %p693 = scmp.lt.s32.totalorder %s34, 1
          %s694 = scalar_select %p693, %s34, 1
          %s695 = smul.addr %s694, 4
          %s696 = smul.addr %s695, 4
          %s697 = scalar_lea.vmem %s17, %s696
        $region88: #{tpu_custom_call.1} parent=19 // pred_fallthru
          _
        // Predicated region
        $region89: #{tpu_custom_call.1} parent=19 // pred_check
          %p698 = pneg %p526
        $region90: #{tpu_custom_call.1} parent=19 // pred_check_branch
          %700 = sbr.rel (%p698) target = $region92
        $region91: #{tpu_custom_call.1} parent=19 // pred_region
          %p701 = scmp.lt.s32.totalorder %s34, 1
          %s702 = scalar_select %p701, %s34, 1
          %s703 = scalar_lea.vmem %s18, %s702
        $region92: #{tpu_custom_call.1} parent=19 // pred_fallthru
          _
      $region20: #{tpu_custom_call.1} parent=5 // pred_fallthru
        _
      %p704 = scmp.le.s32.totalorder 1, %s26
      %p705 = scmp.lt.s32.totalorder %s26, 3
      %p706 = pnand %p704, %p705
      %p707 = pneg %p706
      // Predicated region
      $region93: #{tpu_custom_call.1} parent=5 // pred_check
        _
      $region94: #{tpu_custom_call.1} parent=5 // pred_check_branch
        %709 = sbr.rel (%p706) target = $region96
      $region95: #{tpu_custom_call.1} parent=5 // pred_region
        %s710 = ssub.s32 %s26, 1
        %s711 = smul.u32 2, %s35
        %p712 = scmp.lt.s32.totalorder %s711, 1
        %s713 = scalar_select %p712, %s711, 1
        %s714 = smul.addr %s713, 8
        %s715 = scalar_lea.vmem %s0, %s714
        %p716 = pneg %p64
        %p717 = pneg %p61
        %p718 = scmp.lt.s32.totalorder %s36, 1
        %s719 = scalar_select %p718, %s36, 1
        %s720 = smul.addr %s719, 16
        %s721 = smul.addr %s720, 4
        %s722 = scalar_lea.vmem %s1, %s721
        %p723 = pneg %p90
        %p724 = pneg %p87
        %p725 = scmp.lt.s32.totalorder %s36, 1
        %s726 = scalar_select %p725, %s36, 1
        %s727 = scalar_lea.vmem %s2, %s726
        %p728 = pneg %p116
        %p729 = pneg %p113
        %p730 = scmp.lt.s32.totalorder %s36, 1
        %s731 = scalar_select %p730, %s36, 1
        %s732 = scalar_lea.vmem %s3, %s731
        %p733 = pneg %p142
        %p734 = pneg %p139
        %p735 = scmp.lt.s32.totalorder %s36, 1
        %s736 = scalar_select %p735, %s36, 1
        %s737 = scalar_lea.vmem %s4, %s736
        %p738 = pneg %p168
        %p739 = pneg %p165
        %p740 = scmp.lt.s32.totalorder %s36, 1
        %s741 = scalar_select %p740, %s36, 1
        %s742 = smul.addr %s741, 16
        %s743 = smul.addr %s742, 4
        %s744 = scalar_lea.vmem %s5, %s743
        %p745 = pneg %p194
        %p746 = pneg %p191
        %p747 = scmp.lt.s32.totalorder %s36, 1
        %s748 = scalar_select %p747, %s36, 1
        %s749 = scalar_lea.vmem %s6, %s748
        %p750 = pneg %p220
        %p751 = pneg %p217
        %p752 = scmp.lt.s32.totalorder %s36, 1
        %s753 = scalar_select %p752, %s36, 1
        %s754 = scalar_lea.vmem %s7, %s753
        %p755 = pneg %p246
        %p756 = pneg %p243
        %p757 = scmp.lt.s32.totalorder %s36, 1
        %s758 = scalar_select %p757, %s36, 1
        %s759 = scalar_lea.vmem %s8, %s758
        %p760 = pneg %p272
        %p761 = pneg %p269
        %p762 = scmp.lt.s32.totalorder %s36, 1
        %s763 = scalar_select %p762, %s36, 1
        %s764 = smul.addr %s763, 4
        %s765 = smul.addr %s764, 4
        %s766 = scalar_lea.vmem %s9, %s765
        %p767 = pneg %p298
        %p768 = pneg %p295
        %p769 = scmp.lt.s32.totalorder %s36, 1
        %s770 = scalar_select %p769, %s36, 1
        %s771 = scalar_lea.vmem %s10, %s770
        %p772 = pneg %p324
        %p773 = pneg %p321
        %p774 = scmp.lt.s32.totalorder %s36, 1
        %s775 = scalar_select %p774, %s36, 1
        %s776 = scalar_lea.vmem %s11, %s775
        %p777 = pneg %p350
        %p778 = pneg %p347
        %p779 = scmp.lt.s32.totalorder %s36, 1
        %s780 = scalar_select %p779, %s36, 1
        %s781 = scalar_lea.vmem %s12, %s780
        %p782 = pneg %p376
        %p783 = pneg %p373
        %p784 = scmp.lt.s32.totalorder %s36, 1
        %s785 = scalar_select %p784, %s36, 1
        %s786 = smul.addr %s785, 4
        %s787 = smul.addr %s786, 4
        %s788 = scalar_lea.vmem %s13, %s787
        %p789 = pneg %p402
        %p790 = pneg %p399
        %p791 = scmp.lt.s32.totalorder %s36, 1
        %s792 = scalar_select %p791, %s36, 1
        %s793 = scalar_lea.vmem %s14, %s792
        %p794 = pneg %p428
        %p795 = pneg %p425
        %p796 = scmp.lt.s32.totalorder %s36, 1
        %s797 = scalar_select %p796, %s36, 1
        %s798 = scalar_lea.vmem %s15, %s797
        %p799 = pneg %p454
        %p800 = pneg %p451
        %p801 = scmp.lt.s32.totalorder %s36, 1
        %s802 = scalar_select %p801, %s36, 1
        %s803 = scalar_lea.vmem %s16, %s802
        %p804 = pneg %p480
        %p805 = pneg %p477
        %p806 = scmp.lt.s32.totalorder %s36, 1
        %s807 = scalar_select %p806, %s36, 1
        %s808 = smul.addr %s807, 4
        %s809 = smul.addr %s808, 4
        %s810 = scalar_lea.vmem %s17, %s809
        %p811 = pneg %p506
        %p812 = pneg %p503
        %p813 = scmp.lt.s32.totalorder %s36, 1
        %s814 = scalar_select %p813, %s36, 1
        %s815 = scalar_lea.vmem %s18, %s814
        %p816 = pneg %p532
        %p817 = pneg %p529
        %p818 = pneg %p558
        %p819 = pneg %p555
        %s820 = smul.u32 2, %s35
        %p821 = scmp.lt.s32.totalorder %s820, 1
        %s822 = scalar_select %p821, %s820, 1
        %s823 = smul.addr %s822, 8
        %s824 = scalar_lea.vmem %s0, %s823
        %s825 = smul.u32 2, %s35
        %p826 = scmp.lt.s32.totalorder %s36, 1
        %s827 = scalar_select %p826, %s36, 1
        %s828 = smul.addr %s827, 16
        %s829 = smul.addr %s828, 4
        %s830 = scalar_lea.vmem %s1, %s829
        %p831 = scmp.lt.s32.totalorder %s36, 1
        %s832 = scalar_select %p831, %s36, 1
        %s833 = scalar_lea.vmem %s2, %s832
        %p834 = scmp.lt.s32.totalorder %s36, 1
        %s835 = scalar_select %p834, %s36, 1
        %s836 = scalar_lea.vmem %s3, %s835
        %p837 = scmp.lt.s32.totalorder %s36, 1
        %s838 = scalar_select %p837, %s36, 1
        %s839 = scalar_lea.vmem %s4, %s838
        %p840 = scmp.lt.s32.totalorder %s36, 1
        %s841 = scalar_select %p840, %s36, 1
        %s842 = smul.addr %s841, 16
        %s843 = smul.addr %s842, 4
        %s844 = scalar_lea.vmem %s5, %s843
        %p845 = scmp.lt.s32.totalorder %s36, 1
        %s846 = scalar_select %p845, %s36, 1
        %s847 = scalar_lea.vmem %s6, %s846
        %p848 = scmp.lt.s32.totalorder %s36, 1
        %s849 = scalar_select %p848, %s36, 1
        %s850 = scalar_lea.vmem %s7, %s849
        %p851 = scmp.lt.s32.totalorder %s36, 1
        %s852 = scalar_select %p851, %s36, 1
        %s853 = scalar_lea.vmem %s8, %s852
        %p854 = scmp.lt.s32.totalorder %s36, 1
        %s855 = scalar_select %p854, %s36, 1
        %s856 = smul.addr %s855, 4
        %s857 = smul.addr %s856, 4
        %s858 = scalar_lea.vmem %s9, %s857
        %p859 = scmp.lt.s32.totalorder %s36, 1
        %s860 = scalar_select %p859, %s36, 1
        %s861 = scalar_lea.vmem %s10, %s860
        %p862 = scmp.lt.s32.totalorder %s36, 1
        %s863 = scalar_select %p862, %s36, 1
        %s864 = scalar_lea.vmem %s11, %s863
        %p865 = scmp.lt.s32.totalorder %s36, 1
        %s866 = scalar_select %p865, %s36, 1
        %s867 = scalar_lea.vmem %s12, %s866
        %p868 = scmp.lt.s32.totalorder %s36, 1
        %s869 = scalar_select %p868, %s36, 1
        %s870 = smul.addr %s869, 4
        %s871 = smul.addr %s870, 4
        %s872 = scalar_lea.vmem %s13, %s871
        %p873 = scmp.lt.s32.totalorder %s36, 1
        %s874 = scalar_select %p873, %s36, 1
        %s875 = scalar_lea.vmem %s14, %s874
        %p876 = scmp.lt.s32.totalorder %s36, 1
        %s877 = scalar_select %p876, %s36, 1
        %s878 = scalar_lea.vmem %s15, %s877
        %p879 = scmp.lt.s32.totalorder %s36, 1
        %s880 = scalar_select %p879, %s36, 1
        %s881 = scalar_lea.vmem %s16, %s880
        %p882 = scmp.lt.s32.totalorder %s36, 1
        %s883 = scalar_select %p882, %s36, 1
        %s884 = smul.addr %s883, 4
        %s885 = smul.addr %s884, 4
        %s886 = scalar_lea.vmem %s17, %s885
        %p887 = scmp.lt.s32.totalorder %s36, 1
        %s888 = scalar_select %p887, %s36, 1
        %s889 = scalar_lea.vmem %s18, %s888
        %s890 = smul.u32 2, %s35
        %p892 = scmp.eq.s32.totalorder %s36, 0
        // Predicated region
        $region97: #{tpu_custom_call.1} parent=95 // pred_check
          %p893 = pneg %p892
        $region98: #{tpu_custom_call.1} parent=95 // pred_check_branch
          %895 = sbr.rel (%p893) target = $region100
        $region99: #{tpu_custom_call.1} parent=95 // pred_region
          %v896 = vld [vmem:[%s824] sm:$0xff]
          %v897 = vld [vmem:[%s824 + $0x8] sm:$0xff]
          %898 = vst [vmem:[#allocation2] sm:$0xff] %v896
          %899 = vst [vmem:[#allocation2 + $0x8] sm:$0xff] %v897
        $region100: #{tpu_custom_call.1} parent=95 // pred_fallthru
          _
        %v900 = vlaneseq
        %v901 = vshrl.u32 %v900, 7
        %v902 = vld [vmem:[#allocation2] sm:$0xff]
        %v903 = vld [vmem:[#allocation2 + $0x8] sm:$0xff]
        %v904 = vpack.c.bf16 %v903, %v902
        %v905 = vld [vmem:[%s830] sm:$0xf]
        %v906 = vld [vmem:[%s830 + $0x4] sm:$0xf]
        %v907 = vld [vmem:[%s830 + $0x8] sm:$0xf]
        %v908 = vld [vmem:[%s830 + $0xc] sm:$0xf]
        %v909 = vld [vmem:[%s830 + $0x10] sm:$0xf]
        %v910 = vld [vmem:[%s830 + $0x14] sm:$0xf]
        %v911 = vld [vmem:[%s830 + $0x18] sm:$0xf]
        %v912 = vld [vmem:[%s830 + $0x1c] sm:$0xf]
        %v913 = vld [vmem:[%s830 + $0x20] sm:$0xf]
        %v914 = vld [vmem:[%s830 + $0x24] sm:$0xf]
        %v915 = vld [vmem:[%s830 + $0x28] sm:$0xf]
        %v916 = vld [vmem:[%s830 + $0x2c] sm:$0xf]
        %v917 = vld [vmem:[%s830 + $0x30] sm:$0xf]
        %v918 = vld [vmem:[%s830 + $0x34] sm:$0xf]
        %v919 = vld [vmem:[%s830 + $0x38] sm:$0xf]
        %v920 = vld [vmem:[%s830 + $0x3c] sm:$0xf]
        %v921 = vld [vmem:[%s833] sm:$0x1]
        %v923 = vperm.slane %v921, 0
        %v941 = vunpack.c.l.b16 %v905
        %v942 = vunpack.c.l.b16 %v906
        %v943 = vunpack.c.l.b16 %v907
        %v944 = vunpack.c.l.b16 %v908
        %v945 = vunpack.c.l.b16 %v909
        %v946 = vunpack.c.l.b16 %v910
        %v947 = vunpack.c.l.b16 %v911
        %v948 = vunpack.c.l.b16 %v912
        %v949 = vunpack.c.l.b16 %v913
        %v950 = vunpack.c.l.b16 %v914
        %v951 = vunpack.c.l.b16 %v915
        %v952 = vunpack.c.l.b16 %v916
        %v953 = vunpack.c.l.b16 %v917
        %v954 = vunpack.c.l.b16 %v918
        %v955 = vunpack.c.l.b16 %v919
        %v956 = vunpack.c.l.b16 %v920
        %v957 = vpack.c.b16 %v942, %v941
        %v958 = vpack.c.b16 %v944, %v943
        %v959 = vpack.c.b16 %v946, %v945
        %v960 = vpack.c.b16 %v948, %v947
        %v961 = vpack.c.b16 %v950, %v949
        %v962 = vpack.c.b16 %v952, %v951
        %v963 = vpack.c.b16 %v954, %v953
        %v964 = vpack.c.b16 %v956, %v955
        %973 = vmatpush.bf16.msra.mxu0 %v964
        %974 = vmatpush.bf16.msra.mxu0 %v963
        %975 = vmatpush.bf16.msra.mxu0 %v962
        %976 = vmatpush.bf16.msra.mxu0 %v961
        %977 = vmatpush.bf16.msra.mxu0 %v960
        %978 = vmatpush.bf16.msra.mxu0 %v959
        %979 = vmatpush.bf16.msra.mxu0 %v958
        %980 = vmatpush.bf16.msra.mxu0 %v957
        %981 = vmatmul.bf16.gmra.mxu0 %v904
        %v982 = vpop.f32.mrf.mxu0
        %v983 = vadd.f32 %v923, %v982
        %v984 = vpop.f32.mrf.mxu0
        %v985 = vadd.f32 %v923, %v984
        %986 = vdwg.mxu0
        %v987 = vld [vmem:[%s836] sm:$0x1]
        %v988 = vld [vmem:[%s839] sm:$0x1]
        %vm989 = vcmask 261120
        %v990 = vsel %vm989, %v983, 0.0
        %991 = vadd.xlane.f32.xlu0 %v990
        %v992 = vpop.xlane.xlu0 %991
        %v993 = vsel %vm989, %v985, 0.0
        %994 = vadd.xlane.f32.xlu0 %v993
        %v995 = vpop.xlane.xlu0 %994
        %v996 = vrcp.pop 32.0
        %v997 = vmul.f32 32.0, %v996
        %v998 = vsub.f32 1.0, %v997
        %v999 = vmul.f32 %v996, %v998
        %v1000 = vadd.f32 %v996, %v999
        %vm1001 = vweird.f32 %v996
        %v1002 = vsel %vm1001, %v996, %v1000
        %v1003 = vmul.f32 %v992, %v1002
        %v1004 = vmul.f32 %v995, %v1002
        %v1005 = vsub.f32 %v983, %v1003
        %v1006 = vsub.f32 %v985, %v1004
        %v1007 = vmul.f32 %v1005, %v1005
        %v1008 = vmul.f32 %v1006, %v1006
        %v1009 = vsel %vm989, %v1007, 0.0
        %1010 = vadd.xlane.f32.xlu0 %v1009
        %v1011 = vpop.xlane.xlu0 %1010
        %v1012 = vsel %vm989, %v1008, 0.0
        %1013 = vadd.xlane.f32.xlu0 %v1012
        %v1014 = vpop.xlane.xlu0 %1013
        %v1015 = vmul.f32 %v1011, %v1002
        %v1016 = vmul.f32 %v1014, %v1002
        %v1017 = vadd.f32 %v1015, 1e-05
        %v1018 = vadd.f32 %v1016, 1e-05
        %v1019 = vrsqrt.pop %v1017
        %v1020 = vmul.f32 %v1019, %v1017
        %v1021 = vmul.f32 %v1020, %v1019
        %v1022 = vmul.f32 0.5, %v1021
        %v1023 = vsub.f32 1.5, %v1022
        %v1024 = vmul.f32 %v1019, %v1023
        %vm1025 = vweird.f32 %v1017
        %vm1026 = vweird.f32 %v1019
        %vm1027 = vmor %vm1025, %vm1026
        %v1028 = vsel %vm1027, %v1019, %v1024
        %v1029 = vrsqrt.pop %v1018
        %v1030 = vmul.f32 %v1029, %v1018
        %v1031 = vmul.f32 %v1030, %v1029
        %v1032 = vmul.f32 0.5, %v1031
        %v1033 = vsub.f32 1.5, %v1032
        %v1034 = vmul.f32 %v1029, %v1033
        %vm1035 = vweird.f32 %v1018
        %vm1036 = vweird.f32 %v1029
        %vm1037 = vmor %vm1035, %vm1036
        %v1038 = vsel %vm1037, %v1029, %v1034
        %v1039 = vmul.f32 %v1005, %v1028
        %v1040 = vmul.f32 %v1006, %v1038
        %v1042 = vperm.slane %v987, 0
        %v1044 = vmul.f32 %v1039, %v1042
        %v1045 = vmul.f32 %v1040, %v1042
        %v1047 = vperm.slane %v988, 0
        %v1049 = vadd.f32 %v1044, %v1047
        %v1050 = vadd.f32 %v1045, %v1047
        %v1051 = vpack.c.bf16 %v1050, %v1049
        %v1052 = vld [vmem:[%s858] sm:$0xf]
        %v1053 = vld [vmem:[%s858 + $0x4] sm:$0xf]
        %v1054 = vld [vmem:[%s858 + $0x8] sm:$0xf]
        %v1055 = vld [vmem:[%s858 + $0xc] sm:$0xf]
        %v1060 = vunpack.c.l.b16 %v1052
        %v1061 = vunpack.c.l.b16 %v1053
        %v1062 = vunpack.c.l.b16 %v1054
        %v1063 = vunpack.c.l.b16 %v1055
        %v1064 = vpack.c.b16 %v1061, %v1060
        %v1065 = vpack.c.b16 %v1063, %v1062
        %v1069 = vsel %vm989, %v1051, 0
        %1071 = vmatpush.bf16.msra.mxu0 0
        %1072 = vmatpush.bf16.msra.mxu0 0
        %1073 = vmatpush.bf16.msra.mxu0 0
        %1074 = vmatpush.bf16.msra.mxu0 0
        %1075 = vmatpush.bf16.msra.mxu0 0
        %1076 = vmatpush.bf16.msra.mxu0 0
        %1077 = vmatpush.bf16.msra.mxu0 %v1065
        %1078 = vmatpush.bf16.msra.mxu0 %v1064
        %1079 = vmatmul.bf16.gmra.mxu0 %v1069
        %v1080 = vpop.f32.mrf.mxu0
        %v1081 = vadd.f32 0.0, %v1080
        %v1082 = vpop.f32.mrf.mxu0
        %v1083 = vadd.f32 0.0, %v1082
        %1084 = vdwg.mxu0
        %v1085 = vrot.slane %v1081, 7
        %v1086 = vrot.slane %v1083, 7
        %vm1087 = vcmp.lt.s32.totalorder %v901, 1
        %v1088 = vsel %vm1087, %v1085, %v1086
        %v1089 = vsel %vm1087, %v1086, %v1085
        %1092 = vrot.lane.b32.xlu0 %v1081, 64
        %v1093 = vpop.permute.xlu0 %1092
        %1094 = vrot.lane.b32.xlu0 %v1083, 64
        %v1095 = vpop.permute.xlu0 %1094
        %v1098 = vrot.slane %v1093, 1
        %v1099 = vrot.slane %v1095, 1
        %vm1100 = vcmp.lt.s32.totalorder %v901, 7
        %v1101 = vsel %vm1100, %v1098, %v1099
        %v1102 = vsel %vm1100, %v1099, %v1098
        %vm1103 = vcmp.ge.s32.totalorder %v901, 1
        %v1104 = vsel %vm1103, %v1089, 0.0
        %v1105 = vsel %vm1103, %v1088, 0.0
        %1106 = vrot.lane.b32.xlu0 %v1081, 96
        %v1107 = vpop.permute.xlu0 %1106
        %1108 = vrot.lane.b32.xlu0 %v1083, 96
        %v1109 = vpop.permute.xlu0 %1108
        %v1112 = vadd.f32 %v1104, %v1107
        %v1113 = vadd.f32 %v1105, %v1109
        %vm1114 = vcmp.le.s32.totalorder %v901, 6
        %v1115 = vsel %vm1114, %v1101, 0.0
        %v1116 = vsel %vm1114, %v1102, 0.0
        %v1117 = vadd.f32 %v1112, %v1115
        %v1118 = vadd.f32 %v1113, %v1116
        %v1119 = vld [vmem:[%s861] sm:$0x1]
        %v1121 = vperm.slane %v1119, 0
        %v1123 = vadd.f32 %v1117, %v1121
        %v1124 = vadd.f32 %v1118, %v1121
        %v1125 = vld [vmem:[%s864] sm:$0x1]
        %v1126 = vld [vmem:[%s867] sm:$0x1]
        %v1127 = vsel %vm989, %v1123, 0.0
        %1128 = vadd.xlane.f32.xlu0 %v1127
        %v1129 = vpop.xlane.xlu0 %1128
        %v1130 = vsel %vm989, %v1124, 0.0
        %1131 = vadd.xlane.f32.xlu0 %v1130
        %v1132 = vpop.xlane.xlu0 %1131
        %v1133 = vmul.f32 %v1129, %v1002
        %v1134 = vmul.f32 %v1132, %v1002
        %v1135 = vsub.f32 %v1123, %v1133
        %v1136 = vsub.f32 %v1124, %v1134
        %v1137 = vmul.f32 %v1135, %v1135
        %v1138 = vmul.f32 %v1136, %v1136
        %v1139 = vsel %vm989, %v1137, 0.0
        %1140 = vadd.xlane.f32.xlu0 %v1139
        %v1141 = vpop.xlane.xlu0 %1140
        %v1142 = vsel %vm989, %v1138, 0.0
        %1143 = vadd.xlane.f32.xlu0 %v1142
        %v1144 = vpop.xlane.xlu0 %1143
        %v1145 = vmul.f32 %v1141, %v1002
        %v1146 = vmul.f32 %v1144, %v1002
        %v1147 = vadd.f32 %v1145, 1e-05
        %v1148 = vadd.f32 %v1146, 1e-05
        %v1149 = vrsqrt.pop %v1147
        %v1150 = vmul.f32 %v1149, %v1147
        %v1151 = vmul.f32 %v1150, %v1149
        %v1152 = vmul.f32 0.5, %v1151
        %v1153 = vsub.f32 1.5, %v1152
        %v1154 = vmul.f32 %v1149, %v1153
        %vm1155 = vweird.f32 %v1147
        %vm1156 = vweird.f32 %v1149
        %vm1157 = vmor %vm1155, %vm1156
        %v1158 = vsel %vm1157, %v1149, %v1154
        %v1159 = vrsqrt.pop %v1148
        %v1160 = vmul.f32 %v1159, %v1148
        %v1161 = vmul.f32 %v1160, %v1159
        %v1162 = vmul.f32 0.5, %v1161
        %v1163 = vsub.f32 1.5, %v1162
        %v1164 = vmul.f32 %v1159, %v1163
        %vm1165 = vweird.f32 %v1148
        %vm1166 = vweird.f32 %v1159
        %vm1167 = vmor %vm1165, %vm1166
        %v1168 = vsel %vm1167, %v1159, %v1164
        %v1169 = vmul.f32 %v1135, %v1158
        %v1170 = vmul.f32 %v1136, %v1168
        %v1172 = vperm.slane %v1125, 0
        %v1174 = vmul.f32 %v1169, %v1172
        %v1175 = vmul.f32 %v1170, %v1172
        %v1177 = vperm.slane %v1126, 0
        %v1179 = vadd.f32 %v1174, %v1177
        %v1180 = vadd.f32 %v1175, %v1177
        %v1181 = vxor.u32 %v1179, 2147483648
        %v1182 = vxor.u32 %v1180, 2147483648
        %v1183 = vmul.f32 %v1181, 1.442695
        %v1184 = vpow.pop %v1183
        %v1185 = vmul.f32 %v1182, 1.442695
        %v1186 = vpow.pop %v1185
        %v1187 = vadd.f32 %v1184, 1.0
        %v1188 = vadd.f32 %v1186, 1.0
        %v1189 = vrcp.pop %v1187
        %v1190 = vmul.f32 %v1187, %v1189
        %v1191 = vsub.f32 1.0, %v1190
        %v1192 = vmul.f32 %v1189, %v1191
        %v1193 = vadd.f32 %v1189, %v1192
        %vm1194 = vweird.f32 %v1187
        %vm1195 = vweird.f32 %v1189
        %vm1196 = vmor %vm1194, %vm1195
        %v1197 = vsel %vm1196, %v1189, %v1193
        %v1198 = vand.u32 2147483647, %v1187
        %vm1199 = vcmp.eq.f32.partialorder %v1198, 8.507059e+37
        %v1200 = vand.u32 %v1187, 2147483648
        %v1201 = vor.u32 1.1754944e-38, %v1200
        %v1202 = vsel %vm1199, %v1201, %v1197
        %v1203 = vmul.f32 1.0, %v1202
        %v1204 = vrcp.pop %v1188
        %v1205 = vmul.f32 %v1188, %v1204
        %v1206 = vsub.f32 1.0, %v1205
        %v1207 = vmul.f32 %v1204, %v1206
        %v1208 = vadd.f32 %v1204, %v1207
        %vm1209 = vweird.f32 %v1188
        %vm1210 = vweird.f32 %v1204
        %vm1211 = vmor %vm1209, %vm1210
        %v1212 = vsel %vm1211, %v1204, %v1208
        %v1213 = vand.u32 2147483647, %v1188
        %vm1214 = vcmp.eq.f32.partialorder %v1213, 8.507059e+37
        %v1215 = vand.u32 %v1188, 2147483648
        %v1216 = vor.u32 1.1754944e-38, %v1215
        %v1217 = vsel %vm1214, %v1216, %v1212
        %v1218 = vmul.f32 1.0, %v1217
        %v1219 = vmul.f32 %v1179, %v1203
        %v1220 = vmul.f32 %v1180, %v1218
        %v1221 = vpack.c.bf16 %v1220, %v1219
        %v1222 = vld [vmem:[%s872] sm:$0xf]
        %v1223 = vld [vmem:[%s872 + $0x4] sm:$0xf]
        %v1224 = vld [vmem:[%s872 + $0x8] sm:$0xf]
        %v1225 = vld [vmem:[%s872 + $0xc] sm:$0xf]
        %v1226 = vld [vmem:[%s875] sm:$0x1]
        %v1228 = vperm.slane %v1226, 0
        %v1234 = vunpack.c.l.b16 %v1222
        %v1235 = vunpack.c.l.b16 %v1223
        %v1236 = vunpack.c.l.b16 %v1224
        %v1237 = vunpack.c.l.b16 %v1225
        %v1238 = vpack.c.b16 %v1235, %v1234
        %v1239 = vpack.c.b16 %v1237, %v1236
        %v1243 = vsel %vm989, %v1221, 0
        %1245 = vmatpush.bf16.msra.mxu0 0
        %1246 = vmatpush.bf16.msra.mxu0 0
        %1247 = vmatpush.bf16.msra.mxu0 0
        %1248 = vmatpush.bf16.msra.mxu0 0
        %1249 = vmatpush.bf16.msra.mxu0 0
        %1250 = vmatpush.bf16.msra.mxu0 0
        %1251 = vmatpush.bf16.msra.mxu0 %v1239
        %1252 = vmatpush.bf16.msra.mxu0 %v1238
        %1253 = vmatmul.bf16.gmra.mxu0 %v1243
        %v1254 = vpop.f32.mrf.mxu0
        %v1255 = vadd.f32 %v1228, %v1254
        %v1256 = vpop.f32.mrf.mxu0
        %v1257 = vadd.f32 %v1228, %v1256
        %1258 = vdwg.mxu0
        %v1259 = vxor.u32 %v1255, 2147483648
        %v1260 = vxor.u32 %v1257, 2147483648
        %v1261 = vmul.f32 %v1259, 1.442695
        %v1262 = vpow.pop %v1261
        %v1263 = vmul.f32 %v1260, 1.442695
        %v1264 = vpow.pop %v1263
        %v1265 = vadd.f32 %v1262, 1.0
        %v1266 = vadd.f32 %v1264, 1.0
        %v1267 = vrcp.pop %v1265
        %v1268 = vmul.f32 %v1265, %v1267
        %v1269 = vsub.f32 1.0, %v1268
        %v1270 = vmul.f32 %v1267, %v1269
        %v1271 = vadd.f32 %v1267, %v1270
        %vm1272 = vweird.f32 %v1265
        %vm1273 = vweird.f32 %v1267
        %vm1274 = vmor %vm1272, %vm1273
        %v1275 = vsel %vm1274, %v1267, %v1271
        %v1276 = vand.u32 2147483647, %v1265
        %vm1277 = vcmp.eq.f32.partialorder %v1276, 8.507059e+37
        %v1278 = vand.u32 %v1265, 2147483648
        %v1279 = vor.u32 1.1754944e-38, %v1278
        %v1280 = vsel %vm1277, %v1279, %v1275
        %v1281 = vmul.f32 1.0, %v1280
        %v1282 = vrcp.pop %v1266
        %v1283 = vmul.f32 %v1266, %v1282
        %v1284 = vsub.f32 1.0, %v1283
        %v1285 = vmul.f32 %v1282, %v1284
        %v1286 = vadd.f32 %v1282, %v1285
        %vm1287 = vweird.f32 %v1266
        %vm1288 = vweird.f32 %v1282
        %vm1289 = vmor %vm1287, %vm1288
        %v1290 = vsel %vm1289, %v1282, %v1286
        %v1291 = vand.u32 2147483647, %v1266
        %vm1292 = vcmp.eq.f32.partialorder %v1291, 8.507059e+37
        %v1293 = vand.u32 %v1266, 2147483648
        %v1294 = vor.u32 1.1754944e-38, %v1293
        %v1295 = vsel %vm1292, %v1294, %v1290
        %v1296 = vmul.f32 1.0, %v1295
        %vm1297 = vcmp.ge.f32.partialorder %v1255, 0.0
        %vm1298 = vcmp.ge.f32.partialorder %v1257, 0.0
        %v1299 = vadd.f32 %v1255, 0.5
        %v1300 = vadd.f32 %v1257, 0.5
        %v1301 = vsel %vm1297, %v1299, %v1281
        %v1302 = vsel %vm1298, %v1300, %v1296
        %v1303 = vsub.f32 1.0, %v1281
        %v1304 = vsub.f32 1.0, %v1296
        %1307 = vrot.lane.b32.xlu0 %v1301, 96
        %v1308 = vpop.permute.xlu0 %1307
        %1309 = vrot.lane.b32.xlu0 %v1302, 96
        %v1310 = vpop.permute.xlu0 %1309
        %v1313 = vmul.f32 %v1281, %v1308
        %v1314 = vmul.f32 %v1296, %v1310
        %v1315 = vrot.slane %v1303, 7
        %v1316 = vrot.slane %v1304, 7
        %v1317 = vsel %vm1087, %v1315, %v1316
        %v1318 = vsel %vm1087, %v1316, %v1315
        %v1319 = vrot.slane %v1313, 7
        %v1320 = vrot.slane %v1314, 7
        %v1321 = vsel %vm1087, %v1319, %v1320
        %v1322 = vsel %vm1087, %v1320, %v1319
        %v1323 = vmul.f32 %v1303, %v1318
        %v1324 = vmul.f32 %v1304, %v1317
        %v1325 = vsel %vm1103, %v1323, %v1303
        %v1326 = vsel %vm1103, %v1324, %v1304
        %v1327 = vmul.f32 %v1303, %v1322
        %v1328 = vmul.f32 %v1304, %v1321
        %v1329 = vadd.f32 %v1327, %v1313
        %v1330 = vadd.f32 %v1328, %v1314
        %v1331 = vsel %vm1103, %v1329, %v1313
        %v1332 = vsel %vm1103, %v1330, %v1314
        %v1333 = vrot.slane %v1325, 6
        %v1334 = vrot.slane %v1326, 6
        %vm1335 = vcmp.lt.s32.totalorder %v901, 2
        %v1336 = vsel %vm1335, %v1333, %v1334
        %v1337 = vsel %vm1335, %v1334, %v1333
        %v1338 = vrot.slane %v1331, 6
        %v1339 = vrot.slane %v1332, 6
        %v1340 = vsel %vm1335, %v1338, %v1339
        %v1341 = vsel %vm1335, %v1339, %v1338
        %vm1342 = vcmp.ge.s32.totalorder %v901, 2
        %v1343 = vmul.f32 %v1325, %v1337
        %v1344 = vmul.f32 %v1326, %v1336
        %v1345 = vsel %vm1342, %v1343, %v1325
        %v1346 = vsel %vm1342, %v1344, %v1326
        %v1347 = vmul.f32 %v1325, %v1341
        %v1348 = vmul.f32 %v1326, %v1340
        %v1349 = vadd.f32 %v1347, %v1331
        %v1350 = vadd.f32 %v1348, %v1332
        %v1351 = vsel %vm1342, %v1349, %v1331
        %v1352 = vsel %vm1342, %v1350, %v1332
        %v1353 = vrot.slane %v1345, 4
        %v1354 = vrot.slane %v1346, 4
        %vm1355 = vcmp.lt.s32.totalorder %v901, 4
        %v1356 = vsel %vm1355, %v1353, %v1354
        %v1357 = vsel %vm1355, %v1354, %v1353
        %v1358 = vrot.slane %v1351, 4
        %v1359 = vrot.slane %v1352, 4
        %v1360 = vsel %vm1355, %v1358, %v1359
        %v1361 = vsel %vm1355, %v1359, %v1358
        %vm1362 = vcmp.ge.s32.totalorder %v901, 4
        %v1363 = vmul.f32 %v1345, %v1357
        %v1364 = vmul.f32 %v1346, %v1356
        %v1365 = vsel %vm1362, %v1363, %v1345
        %v1366 = vsel %vm1362, %v1364, %v1346
        %v1367 = vmul.f32 %v1345, %v1361
        %v1368 = vmul.f32 %v1346, %v1360
        %v1369 = vadd.f32 %v1367, %v1351
        %v1370 = vadd.f32 %v1368, %v1352
        %v1371 = vsel %vm1362, %v1369, %v1351
        %v1372 = vsel %vm1362, %v1370, %v1352
        %v1373 = vmul.f32 %v1365, 0.5
        %v1374 = vmul.f32 %v1366, 0.5
        %v1375 = vadd.f32 %v1373, %v1371
        %v1376 = vadd.f32 %v1374, %v1372
        %v1377 = vld [vmem:[%s878] sm:$0x1]
        %v1378 = vld [vmem:[%s881] sm:$0x1]
        %v1379 = vsel %vm989, %v1375, 0.0
        %1380 = vadd.xlane.f32.xlu0 %v1379
        %v1381 = vpop.xlane.xlu0 %1380
        %v1382 = vsel %vm989, %v1376, 0.0
        %1383 = vadd.xlane.f32.xlu0 %v1382
        %v1384 = vpop.xlane.xlu0 %1383
        %v1385 = vmul.f32 %v1381, %v1002
        %v1386 = vmul.f32 %v1384, %v1002
        %v1387 = vsub.f32 %v1375, %v1385
        %v1388 = vsub.f32 %v1376, %v1386
        %v1389 = vmul.f32 %v1387, %v1387
        %v1390 = vmul.f32 %v1388, %v1388
        %v1391 = vsel %vm989, %v1389, 0.0
        %1392 = vadd.xlane.f32.xlu0 %v1391
        %v1393 = vpop.xlane.xlu0 %1392
        %v1394 = vsel %vm989, %v1390, 0.0
        %1395 = vadd.xlane.f32.xlu0 %v1394
        %v1396 = vpop.xlane.xlu0 %1395
        %v1397 = vmul.f32 %v1393, %v1002
        %v1398 = vmul.f32 %v1396, %v1002
        %v1399 = vadd.f32 %v1397, 1e-05
        %v1400 = vadd.f32 %v1398, 1e-05
        %v1401 = vrsqrt.pop %v1399
        %v1402 = vmul.f32 %v1401, %v1399
        %v1403 = vmul.f32 %v1402, %v1401
        %v1404 = vmul.f32 0.5, %v1403
        %v1405 = vsub.f32 1.5, %v1404
        %v1406 = vmul.f32 %v1401, %v1405
        %vm1407 = vweird.f32 %v1399
        %vm1408 = vweird.f32 %v1401
        %vm1409 = vmor %vm1407, %vm1408
        %v1410 = vsel %vm1409, %v1401, %v1406
        %v1411 = vrsqrt.pop %v1400
        %v1412 = vmul.f32 %v1411, %v1400
        %v1413 = vmul.f32 %v1412, %v1411
        %v1414 = vmul.f32 0.5, %v1413
        %v1415 = vsub.f32 1.5, %v1414
        %v1416 = vmul.f32 %v1411, %v1415
        %vm1417 = vweird.f32 %v1400
        %vm1418 = vweird.f32 %v1411
        %vm1419 = vmor %vm1417, %vm1418
        %v1420 = vsel %vm1419, %v1411, %v1416
        %v1421 = vmul.f32 %v1387, %v1410
        %v1422 = vmul.f32 %v1388, %v1420
        %v1424 = vperm.slane %v1377, 0
        %v1426 = vmul.f32 %v1421, %v1424
        %v1427 = vmul.f32 %v1422, %v1424
        %v1429 = vperm.slane %v1378, 0
        %v1431 = vadd.f32 %v1426, %v1429
        %v1432 = vadd.f32 %v1427, %v1429
        %v1433 = vld [vmem:[%s844] sm:$0xf]
        %v1434 = vld [vmem:[%s844 + $0x4] sm:$0xf]
        %v1435 = vld [vmem:[%s844 + $0x8] sm:$0xf]
        %v1436 = vld [vmem:[%s844 + $0xc] sm:$0xf]
        %v1437 = vld [vmem:[%s844 + $0x10] sm:$0xf]
        %v1438 = vld [vmem:[%s844 + $0x14] sm:$0xf]
        %v1439 = vld [vmem:[%s844 + $0x18] sm:$0xf]
        %v1440 = vld [vmem:[%s844 + $0x1c] sm:$0xf]
        %v1441 = vld [vmem:[%s844 + $0x20] sm:$0xf]
        %v1442 = vld [vmem:[%s844 + $0x24] sm:$0xf]
        %v1443 = vld [vmem:[%s844 + $0x28] sm:$0xf]
        %v1444 = vld [vmem:[%s844 + $0x2c] sm:$0xf]
        %v1445 = vld [vmem:[%s844 + $0x30] sm:$0xf]
        %v1446 = vld [vmem:[%s844 + $0x34] sm:$0xf]
        %v1447 = vld [vmem:[%s844 + $0x38] sm:$0xf]
        %v1448 = vld [vmem:[%s844 + $0x3c] sm:$0xf]
        %v1449 = vld [vmem:[%s847] sm:$0x1]
        %v1451 = vperm.slane %v1449, 0
        %v1469 = vunpack.c.l.b16 %v1433
        %v1470 = vunpack.c.l.b16 %v1434
        %v1471 = vunpack.c.l.b16 %v1435
        %v1472 = vunpack.c.l.b16 %v1436
        %v1473 = vunpack.c.l.b16 %v1437
        %v1474 = vunpack.c.l.b16 %v1438
        %v1475 = vunpack.c.l.b16 %v1439
        %v1476 = vunpack.c.l.b16 %v1440
        %v1477 = vunpack.c.l.b16 %v1441
        %v1478 = vunpack.c.l.b16 %v1442
        %v1479 = vunpack.c.l.b16 %v1443
        %v1480 = vunpack.c.l.b16 %v1444
        %v1481 = vunpack.c.l.b16 %v1445
        %v1482 = vunpack.c.l.b16 %v1446
        %v1483 = vunpack.c.l.b16 %v1447
        %v1484 = vunpack.c.l.b16 %v1448
        %v1485 = vpack.c.b16 %v1470, %v1469
        %v1486 = vpack.c.b16 %v1472, %v1471
        %v1487 = vpack.c.b16 %v1474, %v1473
        %v1488 = vpack.c.b16 %v1476, %v1475
        %v1489 = vpack.c.b16 %v1478, %v1477
        %v1490 = vpack.c.b16 %v1480, %v1479
        %v1491 = vpack.c.b16 %v1482, %v1481
        %v1492 = vpack.c.b16 %v1484, %v1483
        %1501 = vmatpush.bf16.msra.mxu0 %v1492
        %1502 = vmatpush.bf16.msra.mxu0 %v1491
        %1503 = vmatpush.bf16.msra.mxu0 %v1490
        %1504 = vmatpush.bf16.msra.mxu0 %v1489
        %1505 = vmatpush.bf16.msra.mxu0 %v1488
        %1506 = vmatpush.bf16.msra.mxu0 %v1487
        %1507 = vmatpush.bf16.msra.mxu0 %v1486
        %1508 = vmatpush.bf16.msra.mxu0 %v1485
        %1509 = vmatmul.bf16.gmra.mxu0 %v904
        %v1510 = vpop.f32.mrf.mxu0
        %v1511 = vadd.f32 %v1451, %v1510
        %v1512 = vpop.f32.mrf.mxu0
        %v1513 = vadd.f32 %v1451, %v1512
        %1514 = vdwg.mxu0
        %v1515 = vld [vmem:[%s850] sm:$0x1]
        %v1516 = vld [vmem:[%s853] sm:$0x1]
        %v1517 = vsel %vm989, %v1511, 0.0
        %1518 = vadd.xlane.f32.xlu0 %v1517
        %v1519 = vpop.xlane.xlu0 %1518
        %v1520 = vsel %vm989, %v1513, 0.0
        %1521 = vadd.xlane.f32.xlu0 %v1520
        %v1522 = vpop.xlane.xlu0 %1521
        %v1523 = vmul.f32 %v1519, %v1002
        %v1524 = vmul.f32 %v1522, %v1002
        %v1525 = vsub.f32 %v1511, %v1523
        %v1526 = vsub.f32 %v1513, %v1524
        %v1527 = vmul.f32 %v1525, %v1525
        %v1528 = vmul.f32 %v1526, %v1526
        %v1529 = vsel %vm989, %v1527, 0.0
        %1530 = vadd.xlane.f32.xlu0 %v1529
        %v1531 = vpop.xlane.xlu0 %1530
        %v1532 = vsel %vm989, %v1528, 0.0
        %1533 = vadd.xlane.f32.xlu0 %v1532
        %v1534 = vpop.xlane.xlu0 %1533
        %v1535 = vmul.f32 %v1531, %v1002
        %v1536 = vmul.f32 %v1534, %v1002
        %v1537 = vadd.f32 %v1535, 1e-05
        %v1538 = vadd.f32 %v1536, 1e-05
        %v1539 = vrsqrt.pop %v1537
        %v1540 = vmul.f32 %v1539, %v1537
        %v1541 = vmul.f32 %v1540, %v1539
        %v1542 = vmul.f32 0.5, %v1541
        %v1543 = vsub.f32 1.5, %v1542
        %v1544 = vmul.f32 %v1539, %v1543
        %vm1545 = vweird.f32 %v1537
        %vm1546 = vweird.f32 %v1539
        %vm1547 = vmor %vm1545, %vm1546
        %v1548 = vsel %vm1547, %v1539, %v1544
        %v1549 = vrsqrt.pop %v1538
        %v1550 = vmul.f32 %v1549, %v1538
        %v1551 = vmul.f32 %v1550, %v1549
        %v1552 = vmul.f32 0.5, %v1551
        %v1553 = vsub.f32 1.5, %v1552
        %v1554 = vmul.f32 %v1549, %v1553
        %vm1555 = vweird.f32 %v1538
        %vm1556 = vweird.f32 %v1549
        %vm1557 = vmor %vm1555, %vm1556
        %v1558 = vsel %vm1557, %v1549, %v1554
        %v1559 = vmul.f32 %v1525, %v1548
        %v1560 = vmul.f32 %v1526, %v1558
        %v1562 = vperm.slane %v1515, 0
        %v1564 = vmul.f32 %v1559, %v1562
        %v1565 = vmul.f32 %v1560, %v1562
        %v1567 = vperm.slane %v1516, 0
        %v1569 = vadd.f32 %v1564, %v1567
        %v1570 = vadd.f32 %v1565, %v1567
        %v1571 = vxor.u32 %v1569, 2147483648
        %v1572 = vxor.u32 %v1570, 2147483648
        %v1573 = vmul.f32 %v1571, 1.442695
        %v1574 = vpow.pop %v1573
        %v1575 = vmul.f32 %v1572, 1.442695
        %v1576 = vpow.pop %v1575
        %v1577 = vadd.f32 %v1574, 1.0
        %v1578 = vadd.f32 %v1576, 1.0
        %v1579 = vrcp.pop %v1577
        %v1580 = vmul.f32 %v1577, %v1579
        %v1581 = vsub.f32 1.0, %v1580
        %v1582 = vmul.f32 %v1579, %v1581
        %v1583 = vadd.f32 %v1579, %v1582
        %vm1584 = vweird.f32 %v1577
        %vm1585 = vweird.f32 %v1579
        %vm1586 = vmor %vm1584, %vm1585
        %v1587 = vsel %vm1586, %v1579, %v1583
        %v1588 = vand.u32 2147483647, %v1577
        %vm1589 = vcmp.eq.f32.partialorder %v1588, 8.507059e+37
        %v1590 = vand.u32 %v1577, 2147483648
        %v1591 = vor.u32 1.1754944e-38, %v1590
        %v1592 = vsel %vm1589, %v1591, %v1587
        %v1593 = vmul.f32 1.0, %v1592
        %v1594 = vrcp.pop %v1578
        %v1595 = vmul.f32 %v1578, %v1594
        %v1596 = vsub.f32 1.0, %v1595
        %v1597 = vmul.f32 %v1594, %v1596
        %v1598 = vadd.f32 %v1594, %v1597
        %vm1599 = vweird.f32 %v1578
        %vm1600 = vweird.f32 %v1594
        %vm1601 = vmor %vm1599, %vm1600
        %v1602 = vsel %vm1601, %v1594, %v1598
        %v1603 = vand.u32 2147483647, %v1578
        %vm1604 = vcmp.eq.f32.partialorder %v1603, 8.507059e+37
        %v1605 = vand.u32 %v1578, 2147483648
        %v1606 = vor.u32 1.1754944e-38, %v1605
        %v1607 = vsel %vm1604, %v1606, %v1602
        %v1608 = vmul.f32 1.0, %v1607
        %v1609 = vmul.f32 %v1569, %v1593
        %v1610 = vmul.f32 %v1570, %v1608
        %v1611 = vmul.f32 %v1431, %v1609
        %v1612 = vmul.f32 %v1432, %v1610
        %v1613 = vpack.c.bf16 %v1612, %v1611
        %v1614 = vld [vmem:[%s886] sm:$0xf]
        %v1615 = vld [vmem:[%s886 + $0x4] sm:$0xf]
        %v1616 = vld [vmem:[%s886 + $0x8] sm:$0xf]
        %v1617 = vld [vmem:[%s886 + $0xc] sm:$0xf]
        %v1618 = vld [vmem:[%s889] sm:$0x1]
        %v1620 = vperm.slane %v1618, 0
        %v1626 = vunpack.c.l.b16 %v1614
        %v1627 = vunpack.c.l.b16 %v1615
        %v1628 = vunpack.c.l.b16 %v1616
        %v1629 = vunpack.c.l.b16 %v1617
        %v1630 = vpack.c.b16 %v1627, %v1626
        %v1631 = vpack.c.b16 %v1629, %v1628
        %v1635 = vsel %vm989, %v1613, 0
        %1637 = vmatpush.bf16.msra.mxu0 0
        %1638 = vmatpush.bf16.msra.mxu0 0
        %1639 = vmatpush.bf16.msra.mxu0 0
        %1640 = vmatpush.bf16.msra.mxu0 0
        %1641 = vmatpush.bf16.msra.mxu0 0
        %1642 = vmatpush.bf16.msra.mxu0 0
        %1643 = vmatpush.bf16.msra.mxu0 %v1631
        %1644 = vmatpush.bf16.msra.mxu0 %v1630
        %1645 = vmatmul.bf16.gmra.mxu0 %v1635
        %v1646 = vpop.f32.mrf.mxu0
        %v1647 = vadd.f32 %v1620, %v1646
        %v1648 = vpop.f32.mrf.mxu0
        %v1649 = vadd.f32 %v1620, %v1648
        %1650 = vdwg.mxu0
        %v1651 = vadd.f32 %v1647, %v902
        %v1652 = vadd.f32 %v1649, %v903
        %1653 = vst [vmem:[#allocation2] sm:$0xff] %v1651
        %1654 = vst [vmem:[#allocation2 + $0x8] sm:$0xff] %v1652
        %p1655 = scmp.eq.s32.totalorder %s36, 1
        // Predicated region
        $region101: #{tpu_custom_call.1} parent=95 // pred_check
          %p1656 = pneg %p1655
        $region102: #{tpu_custom_call.1} parent=95 // pred_check_branch
          %1658 = sbr.rel (%p1656) target = $region104
        $region103: #{tpu_custom_call.1} parent=95 // pred_region
          %1659 = vst [vmem:[#allocation3] sm:$0xff] %v1651
          %1660 = vst [vmem:[#allocation3 + $0x8] sm:$0xff] %v1652
        $region104: #{tpu_custom_call.1} parent=95 // pred_fallthru
          _
        // Predicated region
        $region105: #{tpu_custom_call.1} parent=95 // pred_check
          %p1661 = pneg %p555
        $region106: #{tpu_custom_call.1} parent=95 // pred_check_branch
          %1663 = sbr.rel (%p1661) target = $region108
        $region107: #{tpu_custom_call.1} parent=95 // pred_region
          %s1664 = smul.u32 2, %s35
          %1666 = vsyncadd [#allocation4], 0
          %s1667 = smul.addr %s1664, 8
          %s1668 = scalar_lea.hbm %s19, %s1667
          %s1669 = sshll.u32 [#allocation3], 4
          %s1670 = int_to_ptr.vmem [resolvable:$true] %s1669
          %s1671 = sshll.u32 %s1668, 4
          %s1672 = int_to_ptr.hbm [resolvable:$true] %s1671
          %1677 = dma.vmem_to_hbm [thread:$0]  %s1670, 256, %s1672, [#allocation4], 128, 128, 8
        $region108: #{tpu_custom_call.1} parent=95 // pred_fallthru
          _
        // Predicated region
        $region109: #{tpu_custom_call.1} parent=95 // pred_check
          %p1678 = pneg %p555
        $region110: #{tpu_custom_call.1} parent=95 // pred_check_branch
          %1680 = sbr.rel (%p1678) target = $region112
        $region111: #{tpu_custom_call.1} parent=95 // pred_region
          %1682 = dma.done [#allocation4], 256
        $region112: #{tpu_custom_call.1} parent=95 // pred_fallthru
          _
      $region96: #{tpu_custom_call.1} parent=5 // pred_fallthru
        _
      %p1683 = scmp.le.s32.totalorder 2, %s26
      // Predicated region
      $region113: #{tpu_custom_call.1} parent=5 // pred_check
        %p1684 = pneg %p1683
      $region114: #{tpu_custom_call.1} parent=5 // pred_check_branch
        %1686 = sbr.rel (%p1684) target = $region116
      $region115: #{tpu_custom_call.1} parent=5 // pred_region
        %s1687 = ssub.s32 %s26, 2
      $region116: #{tpu_custom_call.1} parent=5 // pred_fallthru
        _
    $region6: #{tpu_custom_call.1} parent=1 // loop_footer
      %s30 = sadd.s32 1, %s26
    $region7: #{tpu_custom_call.1} parent=1 // loop_footer_branch
      %25 = sbr.rel target = $region3
    $region8: #{tpu_custom_call.1} parent=1 // loop_exit
      _
    %1688 = vsyncpa [#allocation4], 1
    %s1689 = scalar_lea.sflag [#allocation4], 1
    %1690 = vsyncpa %s1689, 1

</llo_original>
